<compile_context>
chip_gen: v6e
topology: v6e:2x2x1
jax: 0.10.0
libtpu: 0.0.40
codegen_flags: <defaults>
</compile_context>

<pallas_src>
import jax
import jax.numpy as jnp
from jax import lax
from jax.experimental import pallas as pl
from jax.experimental.pallas import tpu as pltpu


_SELU_ALPHA = 1.6732632423543772
_SELU_SCALE = 1.0507009873554805
_SCALE_ALPHA = _SELU_SCALE * _SELU_ALPHA

# dot_general dimension numbers contracting the LAST dim of both operands
# ("A @ B.T") -- lets the MXU consume batch-major (TB, d) operands without an
# explicit in-kernel transpose (same pattern as the flash-attention kernels).
_NT = (((1,), (1,)), ((), ()))


def _selu(x):
    # Scale folded into both branches (saves the trailing multiply).
    # TODO(synk): jnp.expm1 would drop one more VALU op but is not guaranteed a
    # Mosaic elementwise lowering, so plain exp() is used.
    return jnp.where(x > 0, _SELU_SCALE * x,
                     _SCALE_ALPHA * jnp.exp(x) - _SCALE_ALPHA)


def resnet_kernel(x_ref, w1_ref, b1_ref, w2_ref, w3_ref, w4a_ref, w4b_ref,
                  w5_ref, b5_ref, o_ref):
    x = x_ref[...]                                                 # (TB, d) bf16

    # fc1 + bias, SELU.  h1: (6d, TB) -- batch on the lane axis from here on.
    h1 = lax.dot_general(w1_ref[...], x, _NT,
                         preferred_element_type=jnp.float32)
    h1 = _selu(h1 + b1_ref[...])
    # TODO(synk): batchnorm1..4 / drop1..4 outputs are discarded in the PyTorch
    # forward, so they are intentionally omitted (functional no-ops).

    # fc2 (no bias), SELU.  h2: (3d, TB)
    h2 = _selu(jnp.dot(w2_ref[...], h1.astype(jnp.bfloat16),
                       preferred_element_type=jnp.float32))

    # fc3 (no bias).  h3: (2d, TB)
    h3 = jnp.dot(w3_ref[...], h2.astype(jnp.bfloat16),
                 preferred_element_type=jnp.float32)

    # SELU(cat(h3, x)) then fc4 (no bias): SELU commutes with the concat, so
    # split fc4's weight columns and sum two matmuls (the skip branch stays in
    # its batch-major layout and uses the NT contraction).
    a = _selu(h3).astype(jnp.bfloat16)                             # (2d, TB)
    b = _selu(x.astype(jnp.float32)).astype(jnp.bfloat16)          # (TB, d)
    h4 = (jnp.dot(w4a_ref[...], a, preferred_element_type=jnp.float32) +
          lax.dot_general(w4b_ref[...], b, _NT,
                          preferred_element_type=jnp.float32))     # (d, TB)
    h4 = _selu(h4)

    # fc5 + bias, sigmoid: VPU multiply + sublane (XLU) reduce instead of an
    # M/N=1 MXU matmul; lane-dense (1, TB) store; EUP approx reciprocal.
    logit = jnp.sum(h4 * w5_ref[...], axis=0, keepdims=True) + b5_ref[...]
    o_ref[...] = pl.reciprocal(1.0 + jnp.exp(-logit), approx=True)


def _round_up(n, m):
    return ((n + m - 1) // m) * m


def resnet_forward(x, params, *, block_batch=2048):
    """x: (B, d) float array. Returns (B,) float32 (matches PyTorch .squeeze()).

    block_batch: batch rows per grid step. 2048-4096 works well on v6e/v7x;
    use ~1024 on v5e (16 MiB scoped-VMEM default).
    """
    w1, b1, w2, w3, w4a, w4b, w5, b5 = params
    B, d = x.shape

    # Batch tile: multiple of 128 so the (1, TB) output block is lane-dense.
    TB = min(_round_up(block_batch, 128), _round_up(B, 128))
    Bp = _round_up(B, TB)
    xb = x.astype(jnp.bfloat16)
    if Bp != B:
        xb = jnp.pad(xb, ((0, Bp - B), (0, 0)))      # pad tail tile (sliced off below)
    n_tiles = Bp // TB

    def const_spec(arr):
        # Full-array block with a constant index_map: DMA'd once, kept resident
        # across grid steps (revisited block => no re-fetch).
        return pl.BlockSpec(arr.shape, lambda i: (0, 0))

    out = pl.pallas_call(
        resnet_kernel,
        grid=(n_tiles,),
        in_specs=[
            pl.BlockSpec((TB, d), lambda i: (i, 0)),        # x: pipelined batch tiles
            const_spec(w1), const_spec(b1), const_spec(w2), const_spec(w3),
            const_spec(w4a), const_spec(w4b), const_spec(w5), const_spec(b5),
        ],
        out_specs=pl.BlockSpec((1, TB), lambda i: (0, i)),  # lane-dense output
        out_shape=jax.ShapeDtypeStruct((1, Bp), jnp.float32),
        compiler_params=pltpu.CompilerParams(
            dimension_semantics=("parallel",)),             # megacore sharding on v7x
    )(xb, w1, b1, w2, w3, w4a, w4b, w5, b5)
    return out[0, :B]


def init_params(key, d):
    """Deterministic init (shapes match the PyTorch module). Weights kept in
    the natural (out_features, in_features) layout; matmul operands stored as
    bf16, biases and the fc5 row stay f32."""
    ks = jax.random.split(key, 7)

    def lin_w(k, fan_out, fan_in):
        bound = 1.0 / jnp.sqrt(fan_in)                  # torch.nn.Linear default
        return jax.random.uniform(k, (fan_out, fan_in), jnp.float32, -bound, bound)

    inv_sqrt_d = 1.0 / jnp.sqrt(d)
    w1 = lin_w(ks[0], 6 * d, d)                         # fc1: d -> 6d
    b1 = jax.random.uniform(ks[1], (6 * d, 1), jnp.float32, -inv_sqrt_d, inv_sqrt_d)
    w2 = lin_w(ks[2], 3 * d, 6 * d)                     # fc2: 6d -> 3d (no bias)
    w3 = lin_w(ks[3], 2 * d, 3 * d)                     # fc3: 3d -> 2d (no bias)
    w4 = lin_w(ks[4], d, 3 * d)                         # fc4: (2d + d) -> d (no bias)
    w4a, w4b = w4[:, :2 * d], w4[:, 2 * d:]             # concat-free column split
    w5 = lin_w(ks[5], 1, d).T                           # fc5 row stored as (d, 1) f32
    b5 = jax.random.uniform(ks[6], (1, 1), jnp.float32, -inv_sqrt_d, inv_sqrt_d)

    bf = lambda t: t.astype(jnp.bfloat16)
    return (bf(w1), b1, bf(w2), bf(w3), bf(w4a), bf(w4b), w5, b5)


def reference_forward(x, params):
    """Pure-JAX reference mirroring the PyTorch forward and the kernel's mixed
    precision (bf16 matmul operands, f32 accumulation & activation math)."""
    w1, b1, w2, w3, w4a, w4b, w5, b5 = params
    up = lambda t: t.astype(jnp.float32)
    bf = lambda t: up(t.astype(jnp.bfloat16))
    xf = bf(x)
    h = _selu(xf @ up(w1).T + up(b1).T)
    h = _selu(bf(h) @ up(w2).T)
    h3 = bf(h) @ up(w3).T
    h = _selu(jnp.concatenate([h3, xf], axis=1))
    w4 = jnp.concatenate([up(w4a), up(w4b)], axis=1)
    h = _selu(bf(h) @ w4.T)
    logit = h @ up(w5) + up(b5)[0]
    return jax.nn.sigmoid(logit)[:, 0]


if __name__ == "__main__":
    key = jax.random.PRNGKey(0)
    kx, kp = jax.random.split(key)

    B, d = 1000, 32               # input_dim = 32; B not a tile multiple on purpose
    x = jax.random.normal(kx, (B, d), jnp.float32)
    params = init_params(kp, d)

    y = resnet_forward(x, params, block_batch=256)   # 4 grid steps at demo size
    y = jax.block_until_ready(y)

    y_ref = reference_forward(x, params)
    assert y.shape == (B,), y.shape
    err = float(jnp.max(jnp.abs(y - y_ref)))
    # bf16 operands are rounded identically in kernel and reference; residual
    # error comes from the EUP exp / approximate-reciprocal sigmoid.
    assert err < 5e-3, err

    print("KERNEL_OK")
</pallas_src>

<mosaic_0001>
module attributes {stable_mosaic.version = 11 : i64} {
  func.func @resnet_kernel(%arg0: i32, %arg1: memref<256x32xbf16, #tpu.memory_space<vmem>>, %arg2: memref<192x32xbf16, #tpu.memory_space<vmem>>, %arg3: memref<192x1xf32, #tpu.memory_space<vmem>>, %arg4: memref<96x192xbf16, #tpu.memory_space<vmem>>, %arg5: memref<64x96xbf16, #tpu.memory_space<vmem>>, %arg6: memref<32x64xbf16, #tpu.memory_space<vmem>>, %arg7: memref<32x32xbf16, #tpu.memory_space<vmem>>, %arg8: memref<32x1xf32, #tpu.memory_space<vmem>>, %arg9: memref<1x1xf32, #tpu.memory_space<vmem>>, %arg10: memref<1x256xf32, #tpu.memory_space<vmem>>) attributes {dimension_semantics = [#tpu.dimension_semantics<parallel>], iteration_bounds = array<i64: 4>, scalar_prefetch = 0 : i64, scratch_operands = 0 : i64, tpu.core_type = #tpu.core_type<tc>, window_params = [{transform_indices = @transform_0, window_bounds = array<i64: 256, 32>}, {pipeline_mode = #tpu.pipeline_mode<synchronous>, transform_indices = @transform_1, window_bounds = array<i64: 192, 32>}, {pipeline_mode = #tpu.pipeline_mode<synchronous>, transform_indices = @transform_2, window_bounds = array<i64: 192, 1>}, {pipeline_mode = #tpu.pipeline_mode<synchronous>, transform_indices = @transform_3, window_bounds = array<i64: 96, 192>}, {pipeline_mode = #tpu.pipeline_mode<synchronous>, transform_indices = @transform_4, window_bounds = array<i64: 64, 96>}, {pipeline_mode = #tpu.pipeline_mode<synchronous>, transform_indices = @transform_5, window_bounds = array<i64: 32, 64>}, {pipeline_mode = #tpu.pipeline_mode<synchronous>, transform_indices = @transform_6, window_bounds = array<i64: 32, 32>}, {pipeline_mode = #tpu.pipeline_mode<synchronous>, transform_indices = @transform_7, window_bounds = array<i64: 32, 1>}, {pipeline_mode = #tpu.pipeline_mode<synchronous>, transform_indices = @transform_8, window_bounds = array<i64: 1, 1>}, {transform_indices = @transform_9, window_bounds = array<i64: 1, 256>}]} {
    %c0 = arith.constant 0 : index
    %c0_0 = arith.constant 0 : index
    %0 = vector.load %arg1[%c0, %c0_0] : memref<256x32xbf16, #tpu.memory_space<vmem>>, vector<256x32xbf16>
    %c0_1 = arith.constant 0 : index
    %c0_2 = arith.constant 0 : index
    %1 = vector.load %arg2[%c0_1, %c0_2] : memref<192x32xbf16, #tpu.memory_space<vmem>>, vector<192x32xbf16>
    %cst = arith.constant dense<0.000000e+00> : vector<192x256xf32>
    %2 = tpu.matmul %1, %0, %cst {dimension_numbers = #tpu.dot_dimension_numbers<[1], [1], [0], [0], [0, 0, 1, 0], [], []>} : vector<192x32xbf16>, vector<256x32xbf16>, vector<192x256xf32> -> vector<192x256xf32>
    %c0_3 = arith.constant 0 : index
    %c0_4 = arith.constant 0 : index
    %3 = vector.load %arg3[%c0_3, %c0_4] : memref<192x1xf32, #tpu.memory_space<vmem>>, vector<192x1xf32>
    %4 = vector.broadcast %3 : vector<192x1xf32> to vector<192x256xf32>
    %5 = arith.addf %2, %4 : vector<192x256xf32>
    %cst_5 = arith.constant 0.000000e+00 : f32
    %6 = vector.broadcast %cst_5 : f32 to vector<192x256xf32>
    %7 = arith.cmpf ogt, %5, %6 : vector<192x256xf32>
    %cst_6 = arith.constant 1.05070102 : f32
    %8 = vector.broadcast %cst_6 : f32 to vector<192x256xf32>
    %9 = arith.mulf %8, %5 : vector<192x256xf32>
    %10 = math.exp %5 : vector<192x256xf32>
    %cst_7 = arith.constant 1.75809932 : f32
    %11 = vector.broadcast %cst_7 : f32 to vector<192x256xf32>
    %12 = arith.mulf %11, %10 : vector<192x256xf32>
    %cst_8 = arith.constant 1.75809932 : f32
    %13 = vector.broadcast %cst_8 : f32 to vector<192x256xf32>
    %14 = arith.subf %12, %13 : vector<192x256xf32>
    %15 = arith.select %7, %9, %14 : vector<192x256xi1>, vector<192x256xf32>
    %c0_9 = arith.constant 0 : index
    %c0_10 = arith.constant 0 : index
    %16 = vector.load %arg4[%c0_9, %c0_10] : memref<96x192xbf16, #tpu.memory_space<vmem>>, vector<96x192xbf16>
    %17 = arith.truncf %15 : vector<192x256xf32> to vector<192x256xbf16>
    %cst_11 = arith.constant dense<0.000000e+00> : vector<96x256xf32>
    %18 = tpu.matmul %16, %17, %cst_11 {dimension_numbers = #tpu.dot_dimension_numbers<[1], [0], [0], [1], [0, 0, 1, 1], [], []>} : vector<96x192xbf16>, vector<192x256xbf16>, vector<96x256xf32> -> vector<96x256xf32>
    %cst_12 = arith.constant 0.000000e+00 : f32
    %19 = vector.broadcast %cst_12 : f32 to vector<96x256xf32>
    %20 = arith.cmpf ogt, %18, %19 : vector<96x256xf32>
    %cst_13 = arith.constant 1.05070102 : f32
    %21 = vector.broadcast %cst_13 : f32 to vector<96x256xf32>
    %22 = arith.mulf %21, %18 : vector<96x256xf32>
    %23 = math.exp %18 : vector<96x256xf32>
    %cst_14 = arith.constant 1.75809932 : f32
    %24 = vector.broadcast %cst_14 : f32 to vector<96x256xf32>
    %25 = arith.mulf %24, %23 : vector<96x256xf32>
    %cst_15 = arith.constant 1.75809932 : f32
    %26 = vector.broadcast %cst_15 : f32 to vector<96x256xf32>
    %27 = arith.subf %25, %26 : vector<96x256xf32>
    %28 = arith.select %20, %22, %27 : vector<96x256xi1>, vector<96x256xf32>
    %c0_16 = arith.constant 0 : index
    %c0_17 = arith.constant 0 : index
    %29 = vector.load %arg5[%c0_16, %c0_17] : memref<64x96xbf16, #tpu.memory_space<vmem>>, vector<64x96xbf16>
    %30 = arith.truncf %28 : vector<96x256xf32> to vector<96x256xbf16>
    %cst_18 = arith.constant dense<0.000000e+00> : vector<64x256xf32>
    %31 = tpu.matmul %29, %30, %cst_18 {dimension_numbers = #tpu.dot_dimension_numbers<[1], [0], [0], [1], [0, 0, 1, 1], [], []>} : vector<64x96xbf16>, vector<96x256xbf16>, vector<64x256xf32> -> vector<64x256xf32>
    %cst_19 = arith.constant 0.000000e+00 : f32
    %32 = vector.broadcast %cst_19 : f32 to vector<64x256xf32>
    %33 = arith.cmpf ogt, %31, %32 : vector<64x256xf32>
    %cst_20 = arith.constant 1.05070102 : f32
    %34 = vector.broadcast %cst_20 : f32 to vector<64x256xf32>
    %35 = arith.mulf %34, %31 : vector<64x256xf32>
    %36 = math.exp %31 : vector<64x256xf32>
    %cst_21 = arith.constant 1.75809932 : f32
    %37 = vector.broadcast %cst_21 : f32 to vector<64x256xf32>
    %38 = arith.mulf %37, %36 : vector<64x256xf32>
    %cst_22 = arith.constant 1.75809932 : f32
    %39 = vector.broadcast %cst_22 : f32 to vector<64x256xf32>
    %40 = arith.subf %38, %39 : vector<64x256xf32>
    %41 = arith.select %33, %35, %40 : vector<64x256xi1>, vector<64x256xf32>
    %42 = arith.truncf %41 : vector<64x256xf32> to vector<64x256xbf16>
    %43 = arith.extf %0 : vector<256x32xbf16> to vector<256x32xf32>
    %cst_23 = arith.constant 0.000000e+00 : f32
    %44 = vector.broadcast %cst_23 : f32 to vector<256x32xf32>
    %45 = arith.cmpf ogt, %43, %44 : vector<256x32xf32>
    %cst_24 = arith.constant 1.05070102 : f32
    %46 = vector.broadcast %cst_24 : f32 to vector<256x32xf32>
    %47 = arith.mulf %46, %43 : vector<256x32xf32>
    %48 = math.exp %43 : vector<256x32xf32>
    %cst_25 = arith.constant 1.75809932 : f32
    %49 = vector.broadcast %cst_25 : f32 to vector<256x32xf32>
    %50 = arith.mulf %49, %48 : vector<256x32xf32>
    %cst_26 = arith.constant 1.75809932 : f32
    %51 = vector.broadcast %cst_26 : f32 to vector<256x32xf32>
    %52 = arith.subf %50, %51 : vector<256x32xf32>
    %53 = arith.select %45, %47, %52 : vector<256x32xi1>, vector<256x32xf32>
    %54 = arith.truncf %53 : vector<256x32xf32> to vector<256x32xbf16>
    %c0_27 = arith.constant 0 : index
    %c0_28 = arith.constant 0 : index
    %55 = vector.load %arg6[%c0_27, %c0_28] : memref<32x64xbf16, #tpu.memory_space<vmem>>, vector<32x64xbf16>
    %cst_29 = arith.constant dense<0.000000e+00> : vector<32x256xf32>
    %56 = tpu.matmul %55, %42, %cst_29 {dimension_numbers = #tpu.dot_dimension_numbers<[1], [0], [0], [1], [0, 0, 1, 1], [], []>} : vector<32x64xbf16>, vector<64x256xbf16>, vector<32x256xf32> -> vector<32x256xf32>
    %c0_30 = arith.constant 0 : index
    %c0_31 = arith.constant 0 : index
    %57 = vector.load %arg7[%c0_30, %c0_31] : memref<32x32xbf16, #tpu.memory_space<vmem>>, vector<32x32xbf16>
    %cst_32 = arith.constant dense<0.000000e+00> : vector<32x256xf32>
    %58 = tpu.matmul %57, %54, %cst_32 {dimension_numbers = #tpu.dot_dimension_numbers<[1], [1], [0], [0], [0, 0, 1, 0], [], []>} : vector<32x32xbf16>, vector<256x32xbf16>, vector<32x256xf32> -> vector<32x256xf32>
    %59 = arith.addf %56, %58 : vector<32x256xf32>
    %cst_33 = arith.constant 0.000000e+00 : f32
    %60 = vector.broadcast %cst_33 : f32 to vector<32x256xf32>
    %61 = arith.cmpf ogt, %59, %60 : vector<32x256xf32>
    %cst_34 = arith.constant 1.05070102 : f32
    %62 = vector.broadcast %cst_34 : f32 to vector<32x256xf32>
    %63 = arith.mulf %62, %59 : vector<32x256xf32>
    %64 = math.exp %59 : vector<32x256xf32>
    %cst_35 = arith.constant 1.75809932 : f32
    %65 = vector.broadcast %cst_35 : f32 to vector<32x256xf32>
    %66 = arith.mulf %65, %64 : vector<32x256xf32>
    %cst_36 = arith.constant 1.75809932 : f32
    %67 = vector.broadcast %cst_36 : f32 to vector<32x256xf32>
    %68 = arith.subf %66, %67 : vector<32x256xf32>
    %69 = arith.select %61, %63, %68 : vector<32x256xi1>, vector<32x256xf32>
    %c0_37 = arith.constant 0 : index
    %c0_38 = arith.constant 0 : index
    %70 = vector.load %arg8[%c0_37, %c0_38] : memref<32x1xf32, #tpu.memory_space<vmem>>, vector<32x1xf32>
    %71 = vector.broadcast %70 : vector<32x1xf32> to vector<32x256xf32>
    %72 = arith.mulf %69, %71 : vector<32x256xf32>
    %cst_39 = arith.constant dense<0.000000e+00> : vector<256xf32>
    %73 = vector.multi_reduction <add>, %72, %cst_39 [0] : vector<32x256xf32> to vector<256xf32>
    %74 = vector.shape_cast %73 : vector<256xf32> to vector<1x256xf32>
    %c0_40 = arith.constant 0 : index
    %c0_41 = arith.constant 0 : index
    %75 = vector.load %arg9[%c0_40, %c0_41] : memref<1x1xf32, #tpu.memory_space<vmem>>, vector<1x1xf32>
    %76 = vector.broadcast %75 : vector<1x1xf32> to vector<1x256xf32>
    %77 = arith.addf %74, %76 : vector<1x256xf32>
    %cst_42 = arith.constant 0.000000e+00 : f32
    %78 = vector.broadcast %cst_42 : f32 to vector<1x256xf32>
    %79 = arith.subf %78, %77 : vector<1x256xf32>
    %80 = math.exp %79 : vector<1x256xf32>
    %cst_43 = arith.constant 1.000000e+00 : f32
    %81 = vector.broadcast %cst_43 : f32 to vector<1x256xf32>
    %82 = arith.addf %81, %80 : vector<1x256xf32>
    %83 = tpu.reciprocal %82 {approx = true} : vector<1x256xf32> -> vector<1x256xf32>
    %c0_44 = arith.constant 0 : index
    %c0_45 = arith.constant 0 : index
    %84 = vector.load %arg10[%c0_44, %c0_45] : memref<1x256xf32, #tpu.memory_space<vmem>>, vector<1x256xf32>
    tpu.vector_store %arg10[%c0_44, %c0_45], %83 {strides = array<i32>} : memref<1x256xf32, #tpu.memory_space<vmem>>, vector<1x256xf32>,
    return
  }
  func.func @transform_0(%arg0: i32) -> (i32, i32) {
    %c0_i32 = arith.constant 0 : i32
    %c0_i32_0 = arith.constant 0 : i32
    return %arg0, %c0_i32 : i32, i32
  }
  func.func @transform_1(%arg0: i32) -> (i32, i32) {
    %c0_i32 = arith.constant 0 : i32
    %c0_i32_0 = arith.constant 0 : i32
    %c0_i32_1 = arith.constant 0 : i32
    return %c0_i32, %c0_i32_0 : i32, i32
  }
  func.func @transform_2(%arg0: i32) -> (i32, i32) {
    %c0_i32 = arith.constant 0 : i32
    %c0_i32_0 = arith.constant 0 : i32
    %c0_i32_1 = arith.constant 0 : i32
    return %c0_i32, %c0_i32_0 : i32, i32
  }
  func.func @transform_3(%arg0: i32) -> (i32, i32) {
    %c0_i32 = arith.constant 0 : i32
    %c0_i32_0 = arith.constant 0 : i32
    %c0_i32_1 = arith.constant 0 : i32
    return %c0_i32, %c0_i32_0 : i32, i32
  }
  func.func @transform_4(%arg0: i32) -> (i32, i32) {
    %c0_i32 = arith.constant 0 : i32
    %c0_i32_0 = arith.constant 0 : i32
    %c0_i32_1 = arith.constant 0 : i32
    return %c0_i32, %c0_i32_0 : i32, i32
  }
  func.func @transform_5(%arg0: i32) -> (i32, i32) {
    %c0_i32 = arith.constant 0 : i32
    %c0_i32_0 = arith.constant 0 : i32
    %c0_i32_1 = arith.constant 0 : i32
    return %c0_i32, %c0_i32_0 : i32, i32
  }
  func.func @transform_6(%arg0: i32) -> (i32, i32) {
    %c0_i32 = arith.constant 0 : i32
    %c0_i32_0 = arith.constant 0 : i32
    %c0_i32_1 = arith.constant 0 : i32
    return %c0_i32, %c0_i32_0 : i32, i32
  }
  func.func @transform_7(%arg0: i32) -> (i32, i32) {
    %c0_i32 = arith.constant 0 : i32
    %c0_i32_0 = arith.constant 0 : i32
    %c0_i32_1 = arith.constant 0 : i32
    return %c0_i32, %c0_i32_0 : i32, i32
  }
  func.func @transform_8(%arg0: i32) -> (i32, i32) {
    %c0_i32 = arith.constant 0 : i32
    %c0_i32_0 = arith.constant 0 : i32
    %c0_i32_1 = arith.constant 0 : i32
    return %c0_i32, %c0_i32_0 : i32, i32
  }
  func.func @transform_9(%arg0: i32) -> (i32, i32) {
    %c0_i32 = arith.constant 0 : i32
    %c0_i32_0 = arith.constant 0 : i32
    return %c0_i32, %arg0 : i32, i32
  }
}

</mosaic_0001>

<llo_original>
// kernel: tpu_custom_call.1
$region0: #{tpu_custom_call.1}
  #allocation0 [shape = 'u32[]', space=smem, size = 0x4, offset = 0x4, fixed_abs, tag = 'smem constant byte address 0x4 - core index']
  #allocation1 [shape = 'u32[144,128]{1,0:T(1,128)}', space=vmem, size = 0x12000, scoped, tag = 'internal scratch']
  #allocation2 [shape = 'f32[1,1]{1,0:T(1,128)S(1)}', space=vmem, size = 0x200, scoped, tag = 'scoped memory for tpu_custom_call.1']
  %s0 = inlined_call_operand.vmem [shape: bf16[1024,32], index: 0, kind: input, shape index: {}]
  %s1 = inlined_call_operand.vmem [shape: bf16[192,32], index: 1, kind: input, shape index: {}]
  %s2 = inlined_call_operand.vmem [shape: f32[192,1], index: 2, kind: input, shape index: {}]
  %s3 = inlined_call_operand.vmem [shape: bf16[96,192], index: 3, kind: input, shape index: {}]
  %s4 = inlined_call_operand.vmem [shape: bf16[64,96], index: 4, kind: input, shape index: {}]
  %s5 = inlined_call_operand.vmem [shape: bf16[32,64], index: 5, kind: input, shape index: {}]
  %s6 = inlined_call_operand.vmem [shape: bf16[32,32], index: 6, kind: input, shape index: {}]
  %s7 = inlined_call_operand.vmem [shape: f32[32,1], index: 7, kind: input, shape index: {}]
  %s8 = inlined_call_operand.<no memory space> [shape: f32[1,1], index: 8, kind: input, shape index: {}]
  %s9 = inlined_call_operand.hbm [shape: f32[1,1024], index: 9, kind: output, shape index: {}]
  %s10 = sld [smem:[#allocation0]]
  $region69: #{tpu_custom_call.1} parent=0
    _
  %s12 = ssub.s32 1, %s10
  %s13 = scalar_select 0, %s12, %s10
  %v14 = vstv %s8
  %15 = vst [vmem:[#allocation2] sm:$0x1] %v14
  $region1: #{tpu_custom_call.1} parent=0
    #allocation3 [shape = 'u8[2048]{0}', space=vmem, size = 0x800, scoped, tag = 'output window, operand 0']
    #allocation4 [shape = 's32[2]{0}', space=sflag, size = 0x8, scoped, tag = 'scoped memory for tpu_custom_call.1']
    %16 = vsyncpa [#allocation4], 0
    %s17 = scalar_lea.sflag [#allocation4], 1
    %18 = vsyncpa %s17, 0
    loop: start=0, step=1, limit=6
    $region2: #{tpu_custom_call.1} parent=1 // loop_pre_header
      _
    $region3: #{tpu_custom_call.1} parent=1 // loop_header
      %s20 = sphi 0, %s24
      %p21 = scmp.ge.s32.totalorder %s20, 6
      %s30 = sphi 0, %s32
      %s33 = sphi 0, %s30
      %s34 = sphi 0, %s33
      %s50 = sphi 0, %s34
      %s54 = sphi 0, %s54
      %s56 = sphi 0, %s54
      %s57 = sphi 0, %s56
      %s71 = sphi 0, %s57
      %s75 = sphi 0, %s75
      %s77 = sphi 0, %s75
      %s78 = sphi 0, %s77
      %s92 = sphi 0, %s78
      %s96 = sphi 0, %s96
      %s98 = sphi 0, %s96
      %s99 = sphi 0, %s98
      %s113 = sphi 0, %s99
      %s117 = sphi 0, %s117
      %s119 = sphi 0, %s117
      %s120 = sphi 0, %s119
      %s134 = sphi 0, %s120
      %s138 = sphi 0, %s138
      %s140 = sphi 0, %s138
      %s141 = sphi 0, %s140
      %s155 = sphi 0, %s141
      %s159 = sphi 0, %s159
      %s161 = sphi 0, %s159
      %s162 = sphi 0, %s161
      %s176 = sphi 0, %s162
      %s180 = sphi 0, %s180
      %s182 = sphi 0, %s180
      %s183 = sphi 0, %s182
      %s197 = sphi 0, %s183
      %s201 = sphi 0, %s201
      %s203 = sphi 0, %s201
      %s204 = sphi 0, %s203
      %s218 = sphi 0, %s204
      %s224 = sphi 0, %s226
      %s227 = sphi 0, %s224
      %s228 = sphi 0, %s227
      %s244 = sphi 0, %s228
    $region4: #{tpu_custom_call.1} parent=1 // loop_header_branch
      %23 = sbr.rel (%p21) target = $region8
    $region5: #{tpu_custom_call.1} parent=1 // loop_body
      %s25 = ssub.s32 %s20, 1
      %s26 = ssub.s32 %s20, 2
      %s27 = sadd.s32 %s20, 1
      %s28 = ssub.s32 %s20, %s27
      %p29 = scmp.eq.s32.totalorder %s28, 0
      %s31 = sadd.s32 %s30, 1
      %s32 = scalar_select %p29, %s30, %s31
      %p35 = pneg %p29
      %p36 = scmp.eq.s32.totalorder %s20, 3
      %p37 = por %p35, %p36
      %p38 = scmp.ne.s32.totalorder %s30, %s33
      %p39 = scmp.eq.s32.totalorder %s20, 0
      %p40 = por %p38, %p39
      %p41 = scmp.ne.s32.totalorder %s30, %s33
      %p42 = scmp.eq.s32.totalorder %s25, 3
      %p43 = por %p41, %p42
      %p44 = scmp.ne.s32.totalorder %s33, %s34
      %p45 = scmp.eq.s32.totalorder %s25, 0
      %p46 = por %p44, %p45
      %p47 = scmp.ne.s32.totalorder %s33, %s34
      %p48 = scmp.eq.s32.totalorder %s26, 3
      %p49 = por %p47, %p48
      %p51 = scmp.ne.s32.totalorder %s34, %s50
      %p52 = scmp.eq.s32.totalorder %s26, 0
      %p53 = por %p51, %p52
      %s55 = sadd.s32 %s54, 1
      %p58 = scmp.eq.s32.totalorder %s20, 3
      %p59 = scmp.ne.s32.totalorder %s54, %s56
      %p60 = scmp.eq.s32.totalorder %s20, 0
      %p61 = por %p59, %p60
      %p62 = scmp.ne.s32.totalorder %s54, %s56
      %p63 = scmp.eq.s32.totalorder %s25, 3
      %p64 = por %p62, %p63
      %p65 = scmp.ne.s32.totalorder %s56, %s57
      %p66 = scmp.eq.s32.totalorder %s25, 0
      %p67 = por %p65, %p66
      %p68 = scmp.ne.s32.totalorder %s56, %s57
      %p69 = scmp.eq.s32.totalorder %s26, 3
      %p70 = por %p68, %p69
      %p72 = scmp.ne.s32.totalorder %s57, %s71
      %p73 = scmp.eq.s32.totalorder %s26, 0
      %p74 = por %p72, %p73
      %s76 = sadd.s32 %s75, 1
      %p79 = scmp.eq.s32.totalorder %s20, 3
      %p80 = scmp.ne.s32.totalorder %s75, %s77
      %p81 = scmp.eq.s32.totalorder %s20, 0
      %p82 = por %p80, %p81
      %p83 = scmp.ne.s32.totalorder %s75, %s77
      %p84 = scmp.eq.s32.totalorder %s25, 3
      %p85 = por %p83, %p84
      %p86 = scmp.ne.s32.totalorder %s77, %s78
      %p87 = scmp.eq.s32.totalorder %s25, 0
      %p88 = por %p86, %p87
      %p89 = scmp.ne.s32.totalorder %s77, %s78
      %p90 = scmp.eq.s32.totalorder %s26, 3
      %p91 = por %p89, %p90
      %p93 = scmp.ne.s32.totalorder %s78, %s92
      %p94 = scmp.eq.s32.totalorder %s26, 0
      %p95 = por %p93, %p94
      %s97 = sadd.s32 %s96, 1
      %p100 = scmp.eq.s32.totalorder %s20, 3
      %p101 = scmp.ne.s32.totalorder %s96, %s98
      %p102 = scmp.eq.s32.totalorder %s20, 0
      %p103 = por %p101, %p102
      %p104 = scmp.ne.s32.totalorder %s96, %s98
      %p105 = scmp.eq.s32.totalorder %s25, 3
      %p106 = por %p104, %p105
      %p107 = scmp.ne.s32.totalorder %s98, %s99
      %p108 = scmp.eq.s32.totalorder %s25, 0
      %p109 = por %p107, %p108
      %p110 = scmp.ne.s32.totalorder %s98, %s99
      %p111 = scmp.eq.s32.totalorder %s26, 3
      %p112 = por %p110, %p111
      %p114 = scmp.ne.s32.totalorder %s99, %s113
      %p115 = scmp.eq.s32.totalorder %s26, 0
      %p116 = por %p114, %p115
      %s118 = sadd.s32 %s117, 1
      %p121 = scmp.eq.s32.totalorder %s20, 3
      %p122 = scmp.ne.s32.totalorder %s117, %s119
      %p123 = scmp.eq.s32.totalorder %s20, 0
      %p124 = por %p122, %p123
      %p125 = scmp.ne.s32.totalorder %s117, %s119
      %p126 = scmp.eq.s32.totalorder %s25, 3
      %p127 = por %p125, %p126
      %p128 = scmp.ne.s32.totalorder %s119, %s120
      %p129 = scmp.eq.s32.totalorder %s25, 0
      %p130 = por %p128, %p129
      %p131 = scmp.ne.s32.totalorder %s119, %s120
      %p132 = scmp.eq.s32.totalorder %s26, 3
      %p133 = por %p131, %p132
      %p135 = scmp.ne.s32.totalorder %s120, %s134
      %p136 = scmp.eq.s32.totalorder %s26, 0
      %p137 = por %p135, %p136
      %s139 = sadd.s32 %s138, 1
      %p142 = scmp.eq.s32.totalorder %s20, 3
      %p143 = scmp.ne.s32.totalorder %s138, %s140
      %p144 = scmp.eq.s32.totalorder %s20, 0
      %p145 = por %p143, %p144
      %p146 = scmp.ne.s32.totalorder %s138, %s140
      %p147 = scmp.eq.s32.totalorder %s25, 3
      %p148 = por %p146, %p147
      %p149 = scmp.ne.s32.totalorder %s140, %s141
      %p150 = scmp.eq.s32.totalorder %s25, 0
      %p151 = por %p149, %p150
      %p152 = scmp.ne.s32.totalorder %s140, %s141
      %p153 = scmp.eq.s32.totalorder %s26, 3
      %p154 = por %p152, %p153
      %p156 = scmp.ne.s32.totalorder %s141, %s155
      %p157 = scmp.eq.s32.totalorder %s26, 0
      %p158 = por %p156, %p157
      %s160 = sadd.s32 %s159, 1
      %p163 = scmp.eq.s32.totalorder %s20, 3
      %p164 = scmp.ne.s32.totalorder %s159, %s161
      %p165 = scmp.eq.s32.totalorder %s20, 0
      %p166 = por %p164, %p165
      %p167 = scmp.ne.s32.totalorder %s159, %s161
      %p168 = scmp.eq.s32.totalorder %s25, 3
      %p169 = por %p167, %p168
      %p170 = scmp.ne.s32.totalorder %s161, %s162
      %p171 = scmp.eq.s32.totalorder %s25, 0
      %p172 = por %p170, %p171
      %p173 = scmp.ne.s32.totalorder %s161, %s162
      %p174 = scmp.eq.s32.totalorder %s26, 3
      %p175 = por %p173, %p174
      %p177 = scmp.ne.s32.totalorder %s162, %s176
      %p178 = scmp.eq.s32.totalorder %s26, 0
      %p179 = por %p177, %p178
      %s181 = sadd.s32 %s180, 1
      %p184 = scmp.eq.s32.totalorder %s20, 3
      %p185 = scmp.ne.s32.totalorder %s180, %s182
      %p186 = scmp.eq.s32.totalorder %s20, 0
      %p187 = por %p185, %p186
      %p188 = scmp.ne.s32.totalorder %s180, %s182
      %p189 = scmp.eq.s32.totalorder %s25, 3
      %p190 = por %p188, %p189
      %p191 = scmp.ne.s32.totalorder %s182, %s183
      %p192 = scmp.eq.s32.totalorder %s25, 0
      %p193 = por %p191, %p192
      %p194 = scmp.ne.s32.totalorder %s182, %s183
      %p195 = scmp.eq.s32.totalorder %s26, 3
      %p196 = por %p194, %p195
      %p198 = scmp.ne.s32.totalorder %s183, %s197
      %p199 = scmp.eq.s32.totalorder %s26, 0
      %p200 = por %p198, %p199
      %s202 = sadd.s32 %s201, 1
      %p205 = scmp.eq.s32.totalorder %s20, 3
      %p206 = scmp.ne.s32.totalorder %s201, %s203
      %p207 = scmp.eq.s32.totalorder %s20, 0
      %p208 = por %p206, %p207
      %p209 = scmp.ne.s32.totalorder %s201, %s203
      %p210 = scmp.eq.s32.totalorder %s25, 3
      %p211 = por %p209, %p210
      %p212 = scmp.ne.s32.totalorder %s203, %s204
      %p213 = scmp.eq.s32.totalorder %s25, 0
      %p214 = por %p212, %p213
      %p215 = scmp.ne.s32.totalorder %s203, %s204
      %p216 = scmp.eq.s32.totalorder %s26, 3
      %p217 = por %p215, %p216
      %p219 = scmp.ne.s32.totalorder %s204, %s218
      %p220 = scmp.eq.s32.totalorder %s26, 0
      %p221 = por %p219, %p220
      %s222 = ssub.s32 %s20, %s27
      %p223 = scmp.eq.s32.totalorder %s222, 0
      %s225 = sadd.s32 %s224, 1
      %s226 = scalar_select %p223, %s224, %s225
      %p229 = pneg %p223
      %p230 = scmp.eq.s32.totalorder %s20, 3
      %p231 = por %p229, %p230
      %p232 = scmp.ne.s32.totalorder %s224, %s227
      %p233 = scmp.eq.s32.totalorder %s20, 0
      %p234 = por %p232, %p233
      %p235 = scmp.ne.s32.totalorder %s224, %s227
      %p236 = scmp.eq.s32.totalorder %s25, 3
      %p237 = por %p235, %p236
      %p238 = scmp.ne.s32.totalorder %s227, %s228
      %p239 = scmp.eq.s32.totalorder %s25, 0
      %p240 = por %p238, %p239
      %p241 = scmp.ne.s32.totalorder %s227, %s228
      %p242 = scmp.eq.s32.totalorder %s26, 3
      %p243 = por %p241, %p242
      %p245 = scmp.ne.s32.totalorder %s228, %s244
      %p246 = scmp.eq.s32.totalorder %s26, 0
      %p247 = por %p245, %p246
      %p248 = scmp.le.s32.totalorder 1, %s20
      %p249 = scmp.lt.s32.totalorder %s20, 5
      %p250 = pnand %p248, %p249
      %p251 = pneg %p250
      // Predicated region
      $region9: #{tpu_custom_call.1} parent=5 // pred_check
        _
      $region10: #{tpu_custom_call.1} parent=5 // pred_check_branch
        %253 = sbr.rel (%p250) target = $region12
      $region11: #{tpu_custom_call.1} parent=5 // pred_region
        %s254 = ssub.s32 %s20, 1
        // Predicated region
        $region13: #{tpu_custom_call.1} parent=11 // pred_check
          %p255 = pneg %p67
        $region14: #{tpu_custom_call.1} parent=11 // pred_check_branch
          %257 = sbr.rel (%p255) target = $region16
        $region15: #{tpu_custom_call.1} parent=11 // pred_region
          _
        $region16: #{tpu_custom_call.1} parent=11 // pred_fallthru
          _
        // Predicated region
        $region17: #{tpu_custom_call.1} parent=11 // pred_check
          %p258 = pneg %p88
        $region18: #{tpu_custom_call.1} parent=11 // pred_check_branch
          %260 = sbr.rel (%p258) target = $region20
        $region19: #{tpu_custom_call.1} parent=11 // pred_region
          _
        $region20: #{tpu_custom_call.1} parent=11 // pred_fallthru
          _
        // Predicated region
        $region21: #{tpu_custom_call.1} parent=11 // pred_check
          %p261 = pneg %p109
        $region22: #{tpu_custom_call.1} parent=11 // pred_check_branch
          %263 = sbr.rel (%p261) target = $region24
        $region23: #{tpu_custom_call.1} parent=11 // pred_region
          _
        $region24: #{tpu_custom_call.1} parent=11 // pred_fallthru
          _
        // Predicated region
        $region25: #{tpu_custom_call.1} parent=11 // pred_check
          %p264 = pneg %p130
        $region26: #{tpu_custom_call.1} parent=11 // pred_check_branch
          %266 = sbr.rel (%p264) target = $region28
        $region27: #{tpu_custom_call.1} parent=11 // pred_region
          _
        $region28: #{tpu_custom_call.1} parent=11 // pred_fallthru
          _
        // Predicated region
        $region29: #{tpu_custom_call.1} parent=11 // pred_check
          %p267 = pneg %p151
        $region30: #{tpu_custom_call.1} parent=11 // pred_check_branch
          %269 = sbr.rel (%p267) target = $region32
        $region31: #{tpu_custom_call.1} parent=11 // pred_region
          _
        $region32: #{tpu_custom_call.1} parent=11 // pred_fallthru
          _
        // Predicated region
        $region33: #{tpu_custom_call.1} parent=11 // pred_check
          %p270 = pneg %p172
        $region34: #{tpu_custom_call.1} parent=11 // pred_check_branch
          %272 = sbr.rel (%p270) target = $region36
        $region35: #{tpu_custom_call.1} parent=11 // pred_region
          _
        $region36: #{tpu_custom_call.1} parent=11 // pred_fallthru
          _
        // Predicated region
        $region37: #{tpu_custom_call.1} parent=11 // pred_check
          %p273 = pneg %p193
        $region38: #{tpu_custom_call.1} parent=11 // pred_check_branch
          %275 = sbr.rel (%p273) target = $region40
        $region39: #{tpu_custom_call.1} parent=11 // pred_region
          _
        $region40: #{tpu_custom_call.1} parent=11 // pred_fallthru
          _
        // Predicated region
        $region41: #{tpu_custom_call.1} parent=11 // pred_check
          %p276 = pneg %p214
        $region42: #{tpu_custom_call.1} parent=11 // pred_check_branch
          %278 = sbr.rel (%p276) target = $region44
        $region43: #{tpu_custom_call.1} parent=11 // pred_region
          _
        $region44: #{tpu_custom_call.1} parent=11 // pred_fallthru
          _
      $region12: #{tpu_custom_call.1} parent=5 // pred_fallthru
        _
      %p279 = scmp.lt.s32.totalorder %s20, 4
      // Predicated region
      $region45: #{tpu_custom_call.1} parent=5 // pred_check
        %p280 = pneg %p279
      $region46: #{tpu_custom_call.1} parent=5 // pred_check_branch
        %282 = sbr.rel (%p280) target = $region48
      $region47: #{tpu_custom_call.1} parent=5 // pred_region
        // Predicated region
        $region49: #{tpu_custom_call.1} parent=47 // pred_check
          %p283 = pneg %p40
        $region50: #{tpu_custom_call.1} parent=47 // pred_check_branch
          %285 = sbr.rel (%p283) target = $region52
        $region51: #{tpu_custom_call.1} parent=47 // pred_region
          %s286 = smul.u32 32, %s20
          %p287 = scmp.lt.s32.totalorder %s286, 127
          %s288 = scalar_select %p287, %s286, 127
          %s289 = smul.addr %s288, 4
          %s290 = scalar_lea.vmem %s0, %s289
          %s291 = smul.u32 32, %s20
        $region52: #{tpu_custom_call.1} parent=47 // pred_fallthru
          _
      $region48: #{tpu_custom_call.1} parent=5 // pred_fallthru
        _
      %p292 = scmp.le.s32.totalorder 1, %s20
      %p293 = scmp.lt.s32.totalorder %s20, 5
      %p294 = pnand %p292, %p293
      %p295 = pneg %p294
      // Predicated region
      $region53: #{tpu_custom_call.1} parent=5 // pred_check
        _
      $region54: #{tpu_custom_call.1} parent=5 // pred_check_branch
        %297 = sbr.rel (%p294) target = $region56
      $region55: #{tpu_custom_call.1} parent=5 // pred_region
        %s298 = ssub.s32 %s20, 1
        %s299 = smul.u32 32, %s25
        %p300 = scmp.lt.s32.totalorder %s299, 127
        %s301 = scalar_select %p300, %s299, 127
        %s302 = smul.addr %s301, 4
        %s303 = scalar_lea.vmem %s0, %s302
        %p304 = pneg %p46
        %p305 = pneg %p43
        %p306 = pneg %p67
        %p307 = pneg %p64
        %p308 = pneg %p88
        %p309 = pneg %p85
        %p310 = pneg %p109
        %p311 = pneg %p106
        %p312 = pneg %p130
        %p313 = pneg %p127
        %p314 = pneg %p151
        %p315 = pneg %p148
        %p316 = pneg %p172
        %p317 = pneg %p169
        %p318 = pneg %p193
        %p319 = pneg %p190
        %p320 = pneg %p214
        %p321 = pneg %p211
        %p322 = pneg %p240
        %p323 = pneg %p237
        %s324 = sand.u32 %s227, 1
        %s325 = scalar_lea.sflag [#allocation4], %s324
        %s326 = sand.u32 %s227, 1
        %s327 = smul.addr %s326, 2
        %s328 = scalar_lea.vmem [#allocation3], %s327
        %s329 = smul.u32 32, %s25
        %p330 = scmp.lt.s32.totalorder %s329, 127
        %s331 = scalar_select %p330, %s329, 127
        %s332 = smul.addr %s331, 4
        %s333 = scalar_lea.vmem %s0, %s332
        %s334 = smul.u32 32, %s25
        %s335 = smul.u32 2, %s25
        %v337 = vld [vmem:[%s333] sm:$0xf]
        %v338 = vld [vmem:[%s333 + $0x4] sm:$0xf]
        %v339 = vld [vmem:[%s333 + $0x8] sm:$0xf]
        %v340 = vld [vmem:[%s333 + $0xc] sm:$0xf]
        %v341 = vld [vmem:[%s333 + $0x10] sm:$0xf]
        %v342 = vld [vmem:[%s333 + $0x14] sm:$0xf]
        %v343 = vld [vmem:[%s333 + $0x18] sm:$0xf]
        %v344 = vld [vmem:[%s333 + $0x1c] sm:$0xf]
        %v345 = vld [vmem:[%s333 + $0x20] sm:$0xf]
        %v346 = vld [vmem:[%s333 + $0x24] sm:$0xf]
        %v347 = vld [vmem:[%s333 + $0x28] sm:$0xf]
        %v348 = vld [vmem:[%s333 + $0x2c] sm:$0xf]
        %v349 = vld [vmem:[%s333 + $0x30] sm:$0xf]
        %v350 = vld [vmem:[%s333 + $0x34] sm:$0xf]
        %v351 = vld [vmem:[%s333 + $0x38] sm:$0xf]
        %v352 = vld [vmem:[%s333 + $0x3c] sm:$0xf]
        %v353 = vld [vmem:[%s333 + $0x40] sm:$0xf]
        %v354 = vld [vmem:[%s333 + $0x44] sm:$0xf]
        %v355 = vld [vmem:[%s333 + $0x48] sm:$0xf]
        %v356 = vld [vmem:[%s333 + $0x4c] sm:$0xf]
        %v357 = vld [vmem:[%s333 + $0x50] sm:$0xf]
        %v358 = vld [vmem:[%s333 + $0x54] sm:$0xf]
        %v359 = vld [vmem:[%s333 + $0x58] sm:$0xf]
        %v360 = vld [vmem:[%s333 + $0x5c] sm:$0xf]
        %v361 = vld [vmem:[%s333 + $0x60] sm:$0xf]
        %v362 = vld [vmem:[%s333 + $0x64] sm:$0xf]
        %v363 = vld [vmem:[%s333 + $0x68] sm:$0xf]
        %v364 = vld [vmem:[%s333 + $0x6c] sm:$0xf]
        %v365 = vld [vmem:[%s333 + $0x70] sm:$0xf]
        %v366 = vld [vmem:[%s333 + $0x74] sm:$0xf]
        %v367 = vld [vmem:[%s333 + $0x78] sm:$0xf]
        %v368 = vld [vmem:[%s333 + $0x7c] sm:$0xf]
        %v369 = vld [vmem:[%s1] sm:$0xf]
        %v370 = vld [vmem:[%s1 + $0x4] sm:$0xf]
        %v371 = vld [vmem:[%s1 + $0x8] sm:$0xf]
        %v372 = vld [vmem:[%s1 + $0xc] sm:$0xf]
        %v373 = vld [vmem:[%s1 + $0x10] sm:$0xf]
        %v374 = vld [vmem:[%s1 + $0x14] sm:$0xf]
        %v375 = vld [vmem:[%s1 + $0x18] sm:$0xf]
        %v376 = vld [vmem:[%s1 + $0x1c] sm:$0xf]
        %v377 = vld [vmem:[%s1 + $0x20] sm:$0xf]
        %v378 = vld [vmem:[%s1 + $0x24] sm:$0xf]
        %v379 = vld [vmem:[%s1 + $0x28] sm:$0xf]
        %v380 = vld [vmem:[%s1 + $0x2c] sm:$0xf]
        %v381 = vld [vmem:[%s1 + $0x30] sm:$0xf]
        %v382 = vld [vmem:[%s1 + $0x34] sm:$0xf]
        %v383 = vld [vmem:[%s1 + $0x38] sm:$0xf]
        %v384 = vld [vmem:[%s1 + $0x3c] sm:$0xf]
        %v385 = vld [vmem:[%s1 + $0x40] sm:$0xf]
        %v386 = vld [vmem:[%s1 + $0x44] sm:$0xf]
        %v387 = vld [vmem:[%s1 + $0x48] sm:$0xf]
        %v388 = vld [vmem:[%s1 + $0x4c] sm:$0xf]
        %v389 = vld [vmem:[%s1 + $0x50] sm:$0xf]
        %v390 = vld [vmem:[%s1 + $0x54] sm:$0xf]
        %v391 = vld [vmem:[%s1 + $0x58] sm:$0xf]
        %v392 = vld [vmem:[%s1 + $0x5c] sm:$0xf]
        %v393 = vld [vmem:[%s2] sm:$0xff]
        %v394 = vld [vmem:[%s2 + $0x8] sm:$0xff]
        %v395 = vld [vmem:[%s2 + $0x10] sm:$0xff]
        %v396 = vld [vmem:[%s2 + $0x18] sm:$0xff]
        %v397 = vld [vmem:[%s2 + $0x20] sm:$0xff]
        %v398 = vld [vmem:[%s2 + $0x28] sm:$0xff]
        %v399 = vld [vmem:[%s2 + $0x30] sm:$0xff]
        %v400 = vld [vmem:[%s2 + $0x38] sm:$0xff]
        %v401 = vld [vmem:[%s2 + $0x40] sm:$0xff]
        %v402 = vld [vmem:[%s2 + $0x48] sm:$0xff]
        %v403 = vld [vmem:[%s2 + $0x50] sm:$0xff]
        %v404 = vld [vmem:[%s2 + $0x58] sm:$0xff]
        %v405 = vld [vmem:[%s2 + $0x60] sm:$0xff]
        %v406 = vld [vmem:[%s2 + $0x68] sm:$0xff]
        %v407 = vld [vmem:[%s2 + $0x70] sm:$0xff]
        %v408 = vld [vmem:[%s2 + $0x78] sm:$0xff]
        %v409 = vld [vmem:[%s2 + $0x80] sm:$0xff]
        %v410 = vld [vmem:[%s2 + $0x88] sm:$0xff]
        %v411 = vld [vmem:[%s2 + $0x90] sm:$0xff]
        %v412 = vld [vmem:[%s2 + $0x98] sm:$0xff]
        %v413 = vld [vmem:[%s2 + $0xa0] sm:$0xff]
        %v414 = vld [vmem:[%s2 + $0xa8] sm:$0xff]
        %v415 = vld [vmem:[%s2 + $0xb0] sm:$0xff]
        %v416 = vld [vmem:[%s2 + $0xb8] sm:$0xff]
        %418 = vset.pattern.permute.xlu0 0
        %419 = vperm.xlu0 %418, %v393
        %v420 = vpop.permute.xlu0 %419
        %423 = vset.pattern.permute.xlu0 0
        %424 = vperm.xlu0 %423, %v394
        %v425 = vpop.permute.xlu0 %424
        %428 = vset.pattern.permute.xlu0 0
        %429 = vperm.xlu0 %428, %v395
        %v430 = vpop.permute.xlu0 %429
        %433 = vset.pattern.permute.xlu0 0
        %434 = vperm.xlu0 %433, %v396
        %v435 = vpop.permute.xlu0 %434
        %438 = vset.pattern.permute.xlu0 0
        %439 = vperm.xlu0 %438, %v397
        %v440 = vpop.permute.xlu0 %439
        %443 = vset.pattern.permute.xlu0 0
        %444 = vperm.xlu0 %443, %v398
        %v445 = vpop.permute.xlu0 %444
        %448 = vset.pattern.permute.xlu0 0
        %449 = vperm.xlu0 %448, %v399
        %v450 = vpop.permute.xlu0 %449
        %453 = vset.pattern.permute.xlu0 0
        %454 = vperm.xlu0 %453, %v400
        %v455 = vpop.permute.xlu0 %454
        %458 = vset.pattern.permute.xlu0 0
        %459 = vperm.xlu0 %458, %v401
        %v460 = vpop.permute.xlu0 %459
        %463 = vset.pattern.permute.xlu0 0
        %464 = vperm.xlu0 %463, %v402
        %v465 = vpop.permute.xlu0 %464
        %468 = vset.pattern.permute.xlu0 0
        %469 = vperm.xlu0 %468, %v403
        %v470 = vpop.permute.xlu0 %469
        %473 = vset.pattern.permute.xlu0 0
        %474 = vperm.xlu0 %473, %v404
        %v475 = vpop.permute.xlu0 %474
        %478 = vset.pattern.permute.xlu0 0
        %479 = vperm.xlu0 %478, %v405
        %v480 = vpop.permute.xlu0 %479
        %483 = vset.pattern.permute.xlu0 0
        %484 = vperm.xlu0 %483, %v406
        %v485 = vpop.permute.xlu0 %484
        %488 = vset.pattern.permute.xlu0 0
        %489 = vperm.xlu0 %488, %v407
        %v490 = vpop.permute.xlu0 %489
        %493 = vset.pattern.permute.xlu0 0
        %494 = vperm.xlu0 %493, %v408
        %v495 = vpop.permute.xlu0 %494
        %498 = vset.pattern.permute.xlu0 0
        %499 = vperm.xlu0 %498, %v409
        %v500 = vpop.permute.xlu0 %499
        %503 = vset.pattern.permute.xlu0 0
        %504 = vperm.xlu0 %503, %v410
        %v505 = vpop.permute.xlu0 %504
        %508 = vset.pattern.permute.xlu0 0
        %509 = vperm.xlu0 %508, %v411
        %v510 = vpop.permute.xlu0 %509
        %513 = vset.pattern.permute.xlu0 0
        %514 = vperm.xlu0 %513, %v412
        %v515 = vpop.permute.xlu0 %514
        %518 = vset.pattern.permute.xlu0 0
        %519 = vperm.xlu0 %518, %v413
        %v520 = vpop.permute.xlu0 %519
        %523 = vset.pattern.permute.xlu0 0
        %524 = vperm.xlu0 %523, %v414
        %v525 = vpop.permute.xlu0 %524
        %528 = vset.pattern.permute.xlu0 0
        %529 = vperm.xlu0 %528, %v415
        %v530 = vpop.permute.xlu0 %529
        %533 = vset.pattern.permute.xlu0 0
        %534 = vperm.xlu0 %533, %v416
        %v535 = vpop.permute.xlu0 %534
        %v561 = vunpack.c.l.b16 %v369
        %v562 = vunpack.c.l.b16 %v370
        %v563 = vunpack.c.l.b16 %v371
        %v564 = vunpack.c.l.b16 %v372
        %v565 = vunpack.c.l.b16 %v373
        %v566 = vunpack.c.l.b16 %v374
        %v567 = vunpack.c.l.b16 %v375
        %v568 = vunpack.c.l.b16 %v376
        %v569 = vunpack.c.l.b16 %v377
        %v570 = vunpack.c.l.b16 %v378
        %v571 = vunpack.c.l.b16 %v379
        %v572 = vunpack.c.l.b16 %v380
        %v573 = vunpack.c.l.b16 %v381
        %v574 = vunpack.c.l.b16 %v382
        %v575 = vunpack.c.l.b16 %v383
        %v576 = vunpack.c.l.b16 %v384
        %v577 = vunpack.c.l.b16 %v385
        %v578 = vunpack.c.l.b16 %v386
        %v579 = vunpack.c.l.b16 %v387
        %v580 = vunpack.c.l.b16 %v388
        %v581 = vunpack.c.l.b16 %v389
        %v582 = vunpack.c.l.b16 %v390
        %v583 = vunpack.c.l.b16 %v391
        %v584 = vunpack.c.l.b16 %v392
        %v585 = vpack.c.b16 %v562, %v561
        %v586 = vpack.c.b16 %v564, %v563
        %v587 = vpack.c.b16 %v566, %v565
        %v588 = vpack.c.b16 %v568, %v567
        %v589 = vpack.c.b16 %v570, %v569
        %v590 = vpack.c.b16 %v572, %v571
        %v591 = vpack.c.b16 %v574, %v573
        %v592 = vpack.c.b16 %v576, %v575
        %v593 = vpack.c.b16 %v578, %v577
        %v594 = vpack.c.b16 %v580, %v579
        %v595 = vpack.c.b16 %v582, %v581
        %v596 = vpack.c.b16 %v584, %v583
        %v629 = vunpack.c.l.b16 %v337
        %v630 = vunpack.c.l.b16 %v338
        %v631 = vunpack.c.l.b16 %v339
        %v632 = vunpack.c.l.b16 %v340
        %v633 = vunpack.c.l.b16 %v341
        %v634 = vunpack.c.l.b16 %v342
        %v635 = vunpack.c.l.b16 %v343
        %v636 = vunpack.c.l.b16 %v344
        %v637 = vunpack.c.l.b16 %v345
        %v638 = vunpack.c.l.b16 %v346
        %v639 = vunpack.c.l.b16 %v347
        %v640 = vunpack.c.l.b16 %v348
        %v641 = vunpack.c.l.b16 %v349
        %v642 = vunpack.c.l.b16 %v350
        %v643 = vunpack.c.l.b16 %v351
        %v644 = vunpack.c.l.b16 %v352
        %v645 = vunpack.c.l.b16 %v353
        %v646 = vunpack.c.l.b16 %v354
        %v647 = vunpack.c.l.b16 %v355
        %v648 = vunpack.c.l.b16 %v356
        %v649 = vunpack.c.l.b16 %v357
        %v650 = vunpack.c.l.b16 %v358
        %v651 = vunpack.c.l.b16 %v359
        %v652 = vunpack.c.l.b16 %v360
        %v653 = vunpack.c.l.b16 %v361
        %v654 = vunpack.c.l.b16 %v362
        %v655 = vunpack.c.l.b16 %v363
        %v656 = vunpack.c.l.b16 %v364
        %v657 = vunpack.c.l.b16 %v365
        %v658 = vunpack.c.l.b16 %v366
        %v659 = vunpack.c.l.b16 %v367
        %v660 = vunpack.c.l.b16 %v368
        %v661 = vpack.c.b16 %v630, %v629
        %v662 = vpack.c.b16 %v632, %v631
        %v663 = vpack.c.b16 %v634, %v633
        %v664 = vpack.c.b16 %v636, %v635
        %v665 = vpack.c.b16 %v638, %v637
        %v666 = vpack.c.b16 %v640, %v639
        %v667 = vpack.c.b16 %v642, %v641
        %v668 = vpack.c.b16 %v644, %v643
        %v669 = vpack.c.b16 %v646, %v645
        %v670 = vpack.c.b16 %v648, %v647
        %v671 = vpack.c.b16 %v650, %v649
        %v672 = vpack.c.b16 %v652, %v651
        %v673 = vpack.c.b16 %v654, %v653
        %v674 = vpack.c.b16 %v656, %v655
        %v675 = vpack.c.b16 %v658, %v657
        %v676 = vpack.c.b16 %v660, %v659
        %vm677 = vcmask 261120
        %v679 = vsel %vm677, %v585, 0
        %v682 = vsel %vm677, %v586, 0
        %v685 = vsel %vm677, %v587, 0
        %v688 = vsel %vm677, %v588, 0
        %v691 = vsel %vm677, %v589, 0
        %v694 = vsel %vm677, %v590, 0
        %v697 = vsel %vm677, %v591, 0
        %v700 = vsel %vm677, %v592, 0
        %v703 = vsel %vm677, %v593, 0
        %v706 = vsel %vm677, %v594, 0
        %v709 = vsel %vm677, %v595, 0
        %v712 = vsel %vm677, %v596, 0
        %v715 = vsel %vm677, %v661, 0
        %v718 = vsel %vm677, %v662, 0
        %v721 = vsel %vm677, %v663, 0
        %v724 = vsel %vm677, %v664, 0
        %v727 = vsel %vm677, %v665, 0
        %v730 = vsel %vm677, %v666, 0
        %v733 = vsel %vm677, %v667, 0
        %v736 = vsel %vm677, %v668, 0
        %v739 = vsel %vm677, %v669, 0
        %v742 = vsel %vm677, %v670, 0
        %v745 = vsel %vm677, %v671, 0
        %v748 = vsel %vm677, %v672, 0
        %v751 = vsel %vm677, %v673, 0
        %v754 = vsel %vm677, %v674, 0
        %v757 = vsel %vm677, %v675, 0
        %v760 = vsel %vm677, %v676, 0
        %762 = vmatprep.subr.bf16.mxu0 0
        %763 = vmatpush1.bf16.xpose.msra.mxu0 %v736
        %764 = vmatprep.subr.bf16.mxu0 0
        %765 = vmatpush1.bf16.xpose.msra.mxu0 %v733
        %766 = vmatprep.subr.bf16.mxu0 0
        %767 = vmatpush1.bf16.xpose.msra.mxu0 %v730
        %768 = vmatprep.subr.bf16.mxu0 0
        %769 = vmatpush1.bf16.xpose.msra.mxu0 %v727
        %770 = vmatprep.subr.bf16.mxu0 0
        %771 = vmatpush1.bf16.xpose.msra.mxu0 %v724
        %772 = vmatprep.subr.bf16.mxu0 0
        %773 = vmatpush1.bf16.xpose.msra.mxu0 %v721
        %774 = vmatprep.subr.bf16.mxu0 0
        %775 = vmatpush1.bf16.xpose.msra.mxu0 %v718
        %776 = vmatprep.subr.bf16.mxu0 0
        %777 = vmatpush1.bf16.xpose.msra.mxu0 %v715
        %778 = vmatprep.subr.bf16.mxu0 0
        %779 = vmatpush2.bf16.xpose.msra.mxu0 %v760
        %780 = vmatprep.subr.bf16.mxu0 0
        %781 = vmatpush2.bf16.xpose.msra.mxu0 %v757
        %782 = vmatprep.subr.bf16.mxu0 0
        %783 = vmatpush2.bf16.xpose.msra.mxu0 %v754
        %784 = vmatprep.subr.bf16.mxu0 0
        %785 = vmatpush2.bf16.xpose.msra.mxu0 %v751
        %786 = vmatprep.subr.bf16.mxu0 0
        %787 = vmatpush2.bf16.xpose.msra.mxu0 %v748
        %788 = vmatprep.subr.bf16.mxu0 0
        %789 = vmatpush2.bf16.xpose.msra.mxu0 %v745
        %790 = vmatprep.subr.bf16.mxu0 0
        %791 = vmatpush2.bf16.xpose.msra.mxu0 %v742
        %792 = vmatprep.subr.bf16.mxu0 0
        %793 = vmatpush2.bf16.xpose.msra.mxu0 %v739
        %794 = vmatprep.mubr.bf16.mxu0 0
        %795 = vmatmul.mubr.bf16.gmra.mxu0 %v679
        %v796 = vpop.f32.mrf.mxu0
        %v797 = vadd.f32 %v420, %v796
        %v798 = vpop.f32.mrf.mxu0
        %v799 = vadd.f32 %v420, %v798
        %v800 = vpop.f32.mrf.mxu0
        %v801 = vadd.f32 %v425, %v800
        %v802 = vpop.f32.mrf.mxu0
        %v803 = vadd.f32 %v425, %v802
        %804 = vmatprep.mubr.bf16.mxu0 0
        %805 = vmatmul.mubr.bf16.gmra.mxu0 %v682
        %v806 = vpop.f32.mrf.mxu0
        %v807 = vadd.f32 %v430, %v806
        %v808 = vpop.f32.mrf.mxu0
        %v809 = vadd.f32 %v430, %v808
        %v810 = vpop.f32.mrf.mxu0
        %v811 = vadd.f32 %v435, %v810
        %v812 = vpop.f32.mrf.mxu0
        %v813 = vadd.f32 %v435, %v812
        %814 = vmatprep.mubr.bf16.mxu0 0
        %815 = vmatmul.mubr.bf16.gmra.mxu0 %v685
        %v816 = vpop.f32.mrf.mxu0
        %v817 = vadd.f32 %v440, %v816
        %v818 = vpop.f32.mrf.mxu0
        %v819 = vadd.f32 %v440, %v818
        %v820 = vpop.f32.mrf.mxu0
        %v821 = vadd.f32 %v445, %v820
        %v822 = vpop.f32.mrf.mxu0
        %v823 = vadd.f32 %v445, %v822
        %824 = vmatprep.mubr.bf16.mxu0 0
        %825 = vmatmul.mubr.bf16.gmra.mxu0 %v688
        %v826 = vpop.f32.mrf.mxu0
        %v827 = vadd.f32 %v450, %v826
        %v828 = vpop.f32.mrf.mxu0
        %v829 = vadd.f32 %v450, %v828
        %v830 = vpop.f32.mrf.mxu0
        %v831 = vadd.f32 %v455, %v830
        %v832 = vpop.f32.mrf.mxu0
        %v833 = vadd.f32 %v455, %v832
        %834 = vmatprep.mubr.bf16.mxu0 0
        %835 = vmatmul.mubr.bf16.gmra.mxu0 %v691
        %v836 = vpop.f32.mrf.mxu0
        %v837 = vadd.f32 %v460, %v836
        %v838 = vpop.f32.mrf.mxu0
        %v839 = vadd.f32 %v460, %v838
        %v840 = vpop.f32.mrf.mxu0
        %v841 = vadd.f32 %v465, %v840
        %v842 = vpop.f32.mrf.mxu0
        %v843 = vadd.f32 %v465, %v842
        %844 = vmatprep.mubr.bf16.mxu0 0
        %845 = vmatmul.mubr.bf16.gmra.mxu0 %v694
        %v846 = vpop.f32.mrf.mxu0
        %v847 = vadd.f32 %v470, %v846
        %v848 = vpop.f32.mrf.mxu0
        %v849 = vadd.f32 %v470, %v848
        %v850 = vpop.f32.mrf.mxu0
        %v851 = vadd.f32 %v475, %v850
        %v852 = vpop.f32.mrf.mxu0
        %v853 = vadd.f32 %v475, %v852
        %854 = vmatprep.mubr.bf16.mxu0 0
        %855 = vmatmul.mubr.bf16.gmra.mxu0 %v697
        %v856 = vpop.f32.mrf.mxu0
        %v857 = vadd.f32 %v480, %v856
        %v858 = vpop.f32.mrf.mxu0
        %v859 = vadd.f32 %v480, %v858
        %v860 = vpop.f32.mrf.mxu0
        %v861 = vadd.f32 %v485, %v860
        %v862 = vpop.f32.mrf.mxu0
        %v863 = vadd.f32 %v485, %v862
        %864 = vmatprep.mubr.bf16.mxu0 0
        %865 = vmatmul.mubr.bf16.gmra.mxu0 %v700
        %v866 = vpop.f32.mrf.mxu0
        %v867 = vadd.f32 %v490, %v866
        %v868 = vpop.f32.mrf.mxu0
        %v869 = vadd.f32 %v490, %v868
        %v870 = vpop.f32.mrf.mxu0
        %v871 = vadd.f32 %v495, %v870
        %v872 = vpop.f32.mrf.mxu0
        %v873 = vadd.f32 %v495, %v872
        %874 = vmatprep.mubr.bf16.mxu0 0
        %875 = vmatmul.mubr.bf16.gmra.mxu0 %v703
        %v876 = vpop.f32.mrf.mxu0
        %v877 = vadd.f32 %v500, %v876
        %v878 = vpop.f32.mrf.mxu0
        %v879 = vadd.f32 %v500, %v878
        %v880 = vpop.f32.mrf.mxu0
        %v881 = vadd.f32 %v505, %v880
        %v882 = vpop.f32.mrf.mxu0
        %v883 = vadd.f32 %v505, %v882
        %884 = vmatprep.mubr.bf16.mxu0 0
        %885 = vmatmul.mubr.bf16.gmra.mxu0 %v706
        %v886 = vpop.f32.mrf.mxu0
        %v887 = vadd.f32 %v510, %v886
        %v888 = vpop.f32.mrf.mxu0
        %v889 = vadd.f32 %v510, %v888
        %v890 = vpop.f32.mrf.mxu0
        %v891 = vadd.f32 %v515, %v890
        %v892 = vpop.f32.mrf.mxu0
        %v893 = vadd.f32 %v515, %v892
        %894 = vmatprep.mubr.bf16.mxu0 0
        %895 = vmatmul.mubr.bf16.gmra.mxu0 %v709
        %v896 = vpop.f32.mrf.mxu0
        %v897 = vadd.f32 %v520, %v896
        %v898 = vpop.f32.mrf.mxu0
        %v899 = vadd.f32 %v520, %v898
        %v900 = vpop.f32.mrf.mxu0
        %v901 = vadd.f32 %v525, %v900
        %v902 = vpop.f32.mrf.mxu0
        %v903 = vadd.f32 %v525, %v902
        %904 = vmatprep.mubr.bf16.mxu0 0
        %905 = vmatmul.mubr.bf16.gmra.mxu0 %v712
        %v906 = vpop.f32.mrf.mxu0
        %v907 = vadd.f32 %v530, %v906
        %v908 = vpop.f32.mrf.mxu0
        %v909 = vadd.f32 %v530, %v908
        %v910 = vpop.f32.mrf.mxu0
        %v911 = vadd.f32 %v535, %v910
        %v912 = vpop.f32.mrf.mxu0
        %v913 = vadd.f32 %v535, %v912
        %914 = vdwg.mxu0
        %vm915 = vcmp.gt.f32.partialorder %v797, 0.0
        %vm916 = vcmp.gt.f32.partialorder %v799, 0.0
        %vm917 = vcmp.gt.f32.partialorder %v801, 0.0
        %vm918 = vcmp.gt.f32.partialorder %v803, 0.0
        %vm919 = vcmp.gt.f32.partialorder %v807, 0.0
        %vm920 = vcmp.gt.f32.partialorder %v809, 0.0
        %vm921 = vcmp.gt.f32.partialorder %v811, 0.0
        %vm922 = vcmp.gt.f32.partialorder %v813, 0.0
        %vm923 = vcmp.gt.f32.partialorder %v817, 0.0
        %vm924 = vcmp.gt.f32.partialorder %v819, 0.0
        %vm925 = vcmp.gt.f32.partialorder %v821, 0.0
        %vm926 = vcmp.gt.f32.partialorder %v823, 0.0
        %vm927 = vcmp.gt.f32.partialorder %v827, 0.0
        %vm928 = vcmp.gt.f32.partialorder %v829, 0.0
        %vm929 = vcmp.gt.f32.partialorder %v831, 0.0
        %vm930 = vcmp.gt.f32.partialorder %v833, 0.0
        %vm931 = vcmp.gt.f32.partialorder %v837, 0.0
        %vm932 = vcmp.gt.f32.partialorder %v839, 0.0
        %vm933 = vcmp.gt.f32.partialorder %v841, 0.0
        %vm934 = vcmp.gt.f32.partialorder %v843, 0.0
        %vm935 = vcmp.gt.f32.partialorder %v847, 0.0
        %vm936 = vcmp.gt.f32.partialorder %v849, 0.0
        %vm937 = vcmp.gt.f32.partialorder %v851, 0.0
        %vm938 = vcmp.gt.f32.partialorder %v853, 0.0
        %vm939 = vcmp.gt.f32.partialorder %v857, 0.0
        %vm940 = vcmp.gt.f32.partialorder %v859, 0.0
        %vm941 = vcmp.gt.f32.partialorder %v861, 0.0
        %vm942 = vcmp.gt.f32.partialorder %v863, 0.0
        %vm943 = vcmp.gt.f32.partialorder %v867, 0.0
        %vm944 = vcmp.gt.f32.partialorder %v869, 0.0
        %vm945 = vcmp.gt.f32.partialorder %v871, 0.0
        %vm946 = vcmp.gt.f32.partialorder %v873, 0.0
        %vm947 = vcmp.gt.f32.partialorder %v877, 0.0
        %vm948 = vcmp.gt.f32.partialorder %v879, 0.0
        %vm949 = vcmp.gt.f32.partialorder %v881, 0.0
        %vm950 = vcmp.gt.f32.partialorder %v883, 0.0
        %vm951 = vcmp.gt.f32.partialorder %v887, 0.0
        %vm952 = vcmp.gt.f32.partialorder %v889, 0.0
        %vm953 = vcmp.gt.f32.partialorder %v891, 0.0
        %vm954 = vcmp.gt.f32.partialorder %v893, 0.0
        %vm955 = vcmp.gt.f32.partialorder %v897, 0.0
        %vm956 = vcmp.gt.f32.partialorder %v899, 0.0
        %vm957 = vcmp.gt.f32.partialorder %v901, 0.0
        %vm958 = vcmp.gt.f32.partialorder %v903, 0.0
        %vm959 = vcmp.gt.f32.partialorder %v907, 0.0
        %vm960 = vcmp.gt.f32.partialorder %v909, 0.0
        %vm961 = vcmp.gt.f32.partialorder %v911, 0.0
        %vm962 = vcmp.gt.f32.partialorder %v913, 0.0
        %v963 = vmul.f32 %v797, 1.050701
        %v964 = vmul.f32 %v799, 1.050701
        %v965 = vmul.f32 %v801, 1.050701
        %v966 = vmul.f32 %v803, 1.050701
        %v967 = vmul.f32 %v807, 1.050701
        %v968 = vmul.f32 %v809, 1.050701
        %v969 = vmul.f32 %v811, 1.050701
        %v970 = vmul.f32 %v813, 1.050701
        %v971 = vmul.f32 %v817, 1.050701
        %v972 = vmul.f32 %v819, 1.050701
        %v973 = vmul.f32 %v821, 1.050701
        %v974 = vmul.f32 %v823, 1.050701
        %v975 = vmul.f32 %v827, 1.050701
        %v976 = vmul.f32 %v829, 1.050701
        %v977 = vmul.f32 %v831, 1.050701
        %v978 = vmul.f32 %v833, 1.050701
        %v979 = vmul.f32 %v837, 1.050701
        %v980 = vmul.f32 %v839, 1.050701
        %v981 = vmul.f32 %v841, 1.050701
        %v982 = vmul.f32 %v843, 1.050701
        %v983 = vmul.f32 %v847, 1.050701
        %v984 = vmul.f32 %v849, 1.050701
        %v985 = vmul.f32 %v851, 1.050701
        %v986 = vmul.f32 %v853, 1.050701
        %v987 = vmul.f32 %v857, 1.050701
        %v988 = vmul.f32 %v859, 1.050701
        %v989 = vmul.f32 %v861, 1.050701
        %v990 = vmul.f32 %v863, 1.050701
        %v991 = vmul.f32 %v867, 1.050701
        %v992 = vmul.f32 %v869, 1.050701
        %v993 = vmul.f32 %v871, 1.050701
        %v994 = vmul.f32 %v873, 1.050701
        %v995 = vmul.f32 %v877, 1.050701
        %v996 = vmul.f32 %v879, 1.050701
        %v997 = vmul.f32 %v881, 1.050701
        %v998 = vmul.f32 %v883, 1.050701
        %v999 = vmul.f32 %v887, 1.050701
        %v1000 = vmul.f32 %v889, 1.050701
        %v1001 = vmul.f32 %v891, 1.050701
        %v1002 = vmul.f32 %v893, 1.050701
        %v1003 = vmul.f32 %v897, 1.050701
        %v1004 = vmul.f32 %v899, 1.050701
        %v1005 = vmul.f32 %v901, 1.050701
        %v1006 = vmul.f32 %v903, 1.050701
        %v1007 = vmul.f32 %v907, 1.050701
        %v1008 = vmul.f32 %v909, 1.050701
        %v1009 = vmul.f32 %v911, 1.050701
        %v1010 = vmul.f32 %v913, 1.050701
        %v1011 = vmul.f32 %v797, 1.442695
        %v1012 = vpow.pop %v1011
        %v1013 = vmul.f32 %v799, 1.442695
        %v1014 = vpow.pop %v1013
        %v1015 = vmul.f32 %v801, 1.442695
        %v1016 = vpow.pop %v1015
        %v1017 = vmul.f32 %v803, 1.442695
        %v1018 = vpow.pop %v1017
        %v1019 = vmul.f32 %v807, 1.442695
        %v1020 = vpow.pop %v1019
        %v1021 = vmul.f32 %v809, 1.442695
        %v1022 = vpow.pop %v1021
        %v1023 = vmul.f32 %v811, 1.442695
        %v1024 = vpow.pop %v1023
        %v1025 = vmul.f32 %v813, 1.442695
        %v1026 = vpow.pop %v1025
        %v1027 = vmul.f32 %v817, 1.442695
        %v1028 = vpow.pop %v1027
        %v1029 = vmul.f32 %v819, 1.442695
        %v1030 = vpow.pop %v1029
        %v1031 = vmul.f32 %v821, 1.442695
        %v1032 = vpow.pop %v1031
        %v1033 = vmul.f32 %v823, 1.442695
        %v1034 = vpow.pop %v1033
        %v1035 = vmul.f32 %v827, 1.442695
        %v1036 = vpow.pop %v1035
        %v1037 = vmul.f32 %v829, 1.442695
        %v1038 = vpow.pop %v1037
        %v1039 = vmul.f32 %v831, 1.442695
        %v1040 = vpow.pop %v1039
        %v1041 = vmul.f32 %v833, 1.442695
        %v1042 = vpow.pop %v1041
        %v1043 = vmul.f32 %v837, 1.442695
        %v1044 = vpow.pop %v1043
        %v1045 = vmul.f32 %v839, 1.442695
        %v1046 = vpow.pop %v1045
        %v1047 = vmul.f32 %v841, 1.442695
        %v1048 = vpow.pop %v1047
        %v1049 = vmul.f32 %v843, 1.442695
        %v1050 = vpow.pop %v1049
        %v1051 = vmul.f32 %v847, 1.442695
        %v1052 = vpow.pop %v1051
        %v1053 = vmul.f32 %v849, 1.442695
        %v1054 = vpow.pop %v1053
        %v1055 = vmul.f32 %v851, 1.442695
        %v1056 = vpow.pop %v1055
        %v1057 = vmul.f32 %v853, 1.442695
        %v1058 = vpow.pop %v1057
        %v1059 = vmul.f32 %v857, 1.442695
        %v1060 = vpow.pop %v1059
        %v1061 = vmul.f32 %v859, 1.442695
        %v1062 = vpow.pop %v1061
        %v1063 = vmul.f32 %v861, 1.442695
        %v1064 = vpow.pop %v1063
        %v1065 = vmul.f32 %v863, 1.442695
        %v1066 = vpow.pop %v1065
        %v1067 = vmul.f32 %v867, 1.442695
        %v1068 = vpow.pop %v1067
        %v1069 = vmul.f32 %v869, 1.442695
        %v1070 = vpow.pop %v1069
        %v1071 = vmul.f32 %v871, 1.442695
        %v1072 = vpow.pop %v1071
        %v1073 = vmul.f32 %v873, 1.442695
        %v1074 = vpow.pop %v1073
        %v1075 = vmul.f32 %v877, 1.442695
        %v1076 = vpow.pop %v1075
        %v1077 = vmul.f32 %v879, 1.442695
        %v1078 = vpow.pop %v1077
        %v1079 = vmul.f32 %v881, 1.442695
        %v1080 = vpow.pop %v1079
        %v1081 = vmul.f32 %v883, 1.442695
        %v1082 = vpow.pop %v1081
        %v1083 = vmul.f32 %v887, 1.442695
        %v1084 = vpow.pop %v1083
        %v1085 = vmul.f32 %v889, 1.442695
        %v1086 = vpow.pop %v1085
        %v1087 = vmul.f32 %v891, 1.442695
        %v1088 = vpow.pop %v1087
        %v1089 = vmul.f32 %v893, 1.442695
        %v1090 = vpow.pop %v1089
        %v1091 = vmul.f32 %v897, 1.442695
        %v1092 = vpow.pop %v1091
        %v1093 = vmul.f32 %v899, 1.442695
        %v1094 = vpow.pop %v1093
        %v1095 = vmul.f32 %v901, 1.442695
        %v1096 = vpow.pop %v1095
        %v1097 = vmul.f32 %v903, 1.442695
        %v1098 = vpow.pop %v1097
        %v1099 = vmul.f32 %v907, 1.442695
        %v1100 = vpow.pop %v1099
        %v1101 = vmul.f32 %v909, 1.442695
        %v1102 = vpow.pop %v1101
        %v1103 = vmul.f32 %v911, 1.442695
        %v1104 = vpow.pop %v1103
        %v1105 = vmul.f32 %v913, 1.442695
        %v1106 = vpow.pop %v1105
        %v1107 = vmul.f32 %v1012, 1.7580993
        %v1108 = vmul.f32 %v1014, 1.7580993
        %v1109 = vmul.f32 %v1016, 1.7580993
        %v1110 = vmul.f32 %v1018, 1.7580993
        %v1111 = vmul.f32 %v1020, 1.7580993
        %v1112 = vmul.f32 %v1022, 1.7580993
        %v1113 = vmul.f32 %v1024, 1.7580993
        %v1114 = vmul.f32 %v1026, 1.7580993
        %v1115 = vmul.f32 %v1028, 1.7580993
        %v1116 = vmul.f32 %v1030, 1.7580993
        %v1117 = vmul.f32 %v1032, 1.7580993
        %v1118 = vmul.f32 %v1034, 1.7580993
        %v1119 = vmul.f32 %v1036, 1.7580993
        %v1120 = vmul.f32 %v1038, 1.7580993
        %v1121 = vmul.f32 %v1040, 1.7580993
        %v1122 = vmul.f32 %v1042, 1.7580993
        %v1123 = vmul.f32 %v1044, 1.7580993
        %v1124 = vmul.f32 %v1046, 1.7580993
        %v1125 = vmul.f32 %v1048, 1.7580993
        %v1126 = vmul.f32 %v1050, 1.7580993
        %v1127 = vmul.f32 %v1052, 1.7580993
        %v1128 = vmul.f32 %v1054, 1.7580993
        %v1129 = vmul.f32 %v1056, 1.7580993
        %v1130 = vmul.f32 %v1058, 1.7580993
        %v1131 = vmul.f32 %v1060, 1.7580993
        %v1132 = vmul.f32 %v1062, 1.7580993
        %v1133 = vmul.f32 %v1064, 1.7580993
        %v1134 = vmul.f32 %v1066, 1.7580993
        %v1135 = vmul.f32 %v1068, 1.7580993
        %v1136 = vmul.f32 %v1070, 1.7580993
        %v1137 = vmul.f32 %v1072, 1.7580993
        %v1138 = vmul.f32 %v1074, 1.7580993
        %v1139 = vmul.f32 %v1076, 1.7580993
        %v1140 = vmul.f32 %v1078, 1.7580993
        %v1141 = vmul.f32 %v1080, 1.7580993
        %v1142 = vmul.f32 %v1082, 1.7580993
        %v1143 = vmul.f32 %v1084, 1.7580993
        %v1144 = vmul.f32 %v1086, 1.7580993
        %v1145 = vmul.f32 %v1088, 1.7580993
        %v1146 = vmul.f32 %v1090, 1.7580993
        %v1147 = vmul.f32 %v1092, 1.7580993
        %v1148 = vmul.f32 %v1094, 1.7580993
        %v1149 = vmul.f32 %v1096, 1.7580993
        %v1150 = vmul.f32 %v1098, 1.7580993
        %v1151 = vmul.f32 %v1100, 1.7580993
        %v1152 = vmul.f32 %v1102, 1.7580993
        %v1153 = vmul.f32 %v1104, 1.7580993
        %v1154 = vmul.f32 %v1106, 1.7580993
        %v1155 = vsub.f32 %v1107, 1.7580993
        %v1156 = vsub.f32 %v1108, 1.7580993
        %v1157 = vsub.f32 %v1109, 1.7580993
        %v1158 = vsub.f32 %v1110, 1.7580993
        %v1159 = vsub.f32 %v1111, 1.7580993
        %v1160 = vsub.f32 %v1112, 1.7580993
        %v1161 = vsub.f32 %v1113, 1.7580993
        %v1162 = vsub.f32 %v1114, 1.7580993
        %v1163 = vsub.f32 %v1115, 1.7580993
        %v1164 = vsub.f32 %v1116, 1.7580993
        %v1165 = vsub.f32 %v1117, 1.7580993
        %v1166 = vsub.f32 %v1118, 1.7580993
        %v1167 = vsub.f32 %v1119, 1.7580993
        %v1168 = vsub.f32 %v1120, 1.7580993
        %v1169 = vsub.f32 %v1121, 1.7580993
        %v1170 = vsub.f32 %v1122, 1.7580993
        %v1171 = vsub.f32 %v1123, 1.7580993
        %v1172 = vsub.f32 %v1124, 1.7580993
        %v1173 = vsub.f32 %v1125, 1.7580993
        %v1174 = vsub.f32 %v1126, 1.7580993
        %v1175 = vsub.f32 %v1127, 1.7580993
        %v1176 = vsub.f32 %v1128, 1.7580993
        %v1177 = vsub.f32 %v1129, 1.7580993
        %v1178 = vsub.f32 %v1130, 1.7580993
        %v1179 = vsub.f32 %v1131, 1.7580993
        %v1180 = vsub.f32 %v1132, 1.7580993
        %v1181 = vsub.f32 %v1133, 1.7580993
        %v1182 = vsub.f32 %v1134, 1.7580993
        %v1183 = vsub.f32 %v1135, 1.7580993
        %v1184 = vsub.f32 %v1136, 1.7580993
        %v1185 = vsub.f32 %v1137, 1.7580993
        %v1186 = vsub.f32 %v1138, 1.7580993
        %v1187 = vsub.f32 %v1139, 1.7580993
        %v1188 = vsub.f32 %v1140, 1.7580993
        %v1189 = vsub.f32 %v1141, 1.7580993
        %v1190 = vsub.f32 %v1142, 1.7580993
        %v1191 = vsub.f32 %v1143, 1.7580993
        %v1192 = vsub.f32 %v1144, 1.7580993
        %v1193 = vsub.f32 %v1145, 1.7580993
        %v1194 = vsub.f32 %v1146, 1.7580993
        %v1195 = vsub.f32 %v1147, 1.7580993
        %v1196 = vsub.f32 %v1148, 1.7580993
        %v1197 = vsub.f32 %v1149, 1.7580993
        %v1198 = vsub.f32 %v1150, 1.7580993
        %v1199 = vsub.f32 %v1151, 1.7580993
        %v1200 = vsub.f32 %v1152, 1.7580993
        %v1201 = vsub.f32 %v1153, 1.7580993
        %v1202 = vsub.f32 %v1154, 1.7580993
        %v1203 = vsel %vm915, %v963, %v1155
        %v1204 = vsel %vm916, %v964, %v1156
        %v1205 = vsel %vm917, %v965, %v1157
        %v1206 = vsel %vm918, %v966, %v1158
        %v1207 = vsel %vm919, %v967, %v1159
        %v1208 = vsel %vm920, %v968, %v1160
        %v1209 = vsel %vm921, %v969, %v1161
        %v1210 = vsel %vm922, %v970, %v1162
        %v1211 = vsel %vm923, %v971, %v1163
        %v1212 = vsel %vm924, %v972, %v1164
        %v1213 = vsel %vm925, %v973, %v1165
        %v1214 = vsel %vm926, %v974, %v1166
        %v1215 = vsel %vm927, %v975, %v1167
        %v1216 = vsel %vm928, %v976, %v1168
        %v1217 = vsel %vm929, %v977, %v1169
        %v1218 = vsel %vm930, %v978, %v1170
        %v1219 = vsel %vm931, %v979, %v1171
        %v1220 = vsel %vm932, %v980, %v1172
        %v1221 = vsel %vm933, %v981, %v1173
        %v1222 = vsel %vm934, %v982, %v1174
        %v1223 = vsel %vm935, %v983, %v1175
        %v1224 = vsel %vm936, %v984, %v1176
        %v1225 = vsel %vm937, %v985, %v1177
        %v1226 = vsel %vm938, %v986, %v1178
        %v1227 = vsel %vm939, %v987, %v1179
        %v1228 = vsel %vm940, %v988, %v1180
        %v1229 = vsel %vm941, %v989, %v1181
        %v1230 = vsel %vm942, %v990, %v1182
        %v1231 = vsel %vm943, %v991, %v1183
        %v1232 = vsel %vm944, %v992, %v1184
        %v1233 = vsel %vm945, %v993, %v1185
        %v1234 = vsel %vm946, %v994, %v1186
        %v1235 = vsel %vm947, %v995, %v1187
        %v1236 = vsel %vm948, %v996, %v1188
        %v1237 = vsel %vm949, %v997, %v1189
        %v1238 = vsel %vm950, %v998, %v1190
        %v1239 = vsel %vm951, %v999, %v1191
        %v1240 = vsel %vm952, %v1000, %v1192
        %v1241 = vsel %vm953, %v1001, %v1193
        %v1242 = vsel %vm954, %v1002, %v1194
        %v1243 = vsel %vm955, %v1003, %v1195
        %v1244 = vsel %vm956, %v1004, %v1196
        %v1245 = vsel %vm957, %v1005, %v1197
        %v1246 = vsel %vm958, %v1006, %v1198
        %v1247 = vsel %vm959, %v1007, %v1199
        %v1248 = vsel %vm960, %v1008, %v1200
        %v1249 = vsel %vm961, %v1009, %v1201
        %v1250 = vsel %vm962, %v1010, %v1202
        %v1251 = vld [vmem:[%s3] sm:$0xff]
        %v1252 = vld [vmem:[%s3 + $0x8] sm:$0xff]
        %v1253 = vld [vmem:[%s3 + $0x10] sm:$0xff]
        %v1254 = vld [vmem:[%s3 + $0x18] sm:$0xff]
        %v1255 = vld [vmem:[%s3 + $0x20] sm:$0xff]
        %v1256 = vld [vmem:[%s3 + $0x28] sm:$0xff]
        %v1257 = vld [vmem:[%s3 + $0x30] sm:$0xff]
        %v1258 = vld [vmem:[%s3 + $0x38] sm:$0xff]
        %v1259 = vld [vmem:[%s3 + $0x40] sm:$0xff]
        %v1260 = vld [vmem:[%s3 + $0x48] sm:$0xff]
        %v1261 = vld [vmem:[%s3 + $0x50] sm:$0xff]
        %v1262 = vld [vmem:[%s3 + $0x58] sm:$0xff]
        %v1263 = vpack.c.bf16 %v1205, %v1203
        %v1264 = vpack.c.bf16 %v1206, %v1204
        %v1265 = vpack.c.bf16 %v1209, %v1207
        %v1266 = vpack.c.bf16 %v1210, %v1208
        %v1267 = vpack.c.bf16 %v1213, %v1211
        %v1268 = vpack.c.bf16 %v1214, %v1212
        %v1269 = vpack.c.bf16 %v1217, %v1215
        %v1270 = vpack.c.bf16 %v1218, %v1216
        %v1271 = vpack.c.bf16 %v1221, %v1219
        %v1272 = vpack.c.bf16 %v1222, %v1220
        %v1273 = vpack.c.bf16 %v1225, %v1223
        %v1274 = vpack.c.bf16 %v1226, %v1224
        %v1275 = vpack.c.bf16 %v1229, %v1227
        %v1276 = vpack.c.bf16 %v1230, %v1228
        %v1277 = vpack.c.bf16 %v1233, %v1231
        %v1278 = vpack.c.bf16 %v1234, %v1232
        %v1279 = vpack.c.bf16 %v1237, %v1235
        %v1280 = vpack.c.bf16 %v1238, %v1236
        %v1281 = vpack.c.bf16 %v1241, %v1239
        %v1282 = vpack.c.bf16 %v1242, %v1240
        %v1283 = vpack.c.bf16 %v1245, %v1243
        %v1284 = vpack.c.bf16 %v1246, %v1244
        %v1285 = vpack.c.bf16 %v1249, %v1247
        %v1286 = vpack.c.bf16 %v1250, %v1248
        %v1299 = vunpack.c.l.b16 %v1251
        %v1300 = vunpack.c.h.b16 %v1251
        %v1301 = vunpack.c.l.b16 %v1252
        %v1302 = vunpack.c.h.b16 %v1252
        %v1303 = vunpack.c.l.b16 %v1253
        %v1304 = vunpack.c.h.b16 %v1253
        %v1305 = vunpack.c.l.b16 %v1254
        %v1306 = vunpack.c.h.b16 %v1254
        %v1307 = vunpack.c.l.b16 %v1255
        %v1308 = vunpack.c.h.b16 %v1255
        %v1309 = vunpack.c.l.b16 %v1256
        %v1310 = vunpack.c.h.b16 %v1256
        %v1311 = vunpack.c.l.b16 %v1257
        %v1312 = vunpack.c.h.b16 %v1257
        %v1313 = vunpack.c.l.b16 %v1258
        %v1314 = vunpack.c.h.b16 %v1258
        %v1315 = vunpack.c.l.b16 %v1259
        %v1316 = vunpack.c.h.b16 %v1259
        %v1317 = vunpack.c.l.b16 %v1260
        %v1318 = vunpack.c.h.b16 %v1260
        %v1319 = vunpack.c.l.b16 %v1261
        %v1320 = vunpack.c.h.b16 %v1261
        %v1321 = vunpack.c.l.b16 %v1262
        %v1322 = vunpack.c.h.b16 %v1262
        %v1323 = vpack.c.b16 %v1301, %v1299
        %v1324 = vpack.c.b16 %v1302, %v1300
        %v1325 = vpack.c.b16 %v1305, %v1303
        %v1326 = vpack.c.b16 %v1306, %v1304
        %v1327 = vpack.c.b16 %v1309, %v1307
        %v1328 = vpack.c.b16 %v1310, %v1308
        %v1329 = vpack.c.b16 %v1313, %v1311
        %v1330 = vpack.c.b16 %v1314, %v1312
        %v1331 = vpack.c.b16 %v1317, %v1315
        %v1332 = vpack.c.b16 %v1318, %v1316
        %v1333 = vpack.c.b16 %v1321, %v1319
        %v1334 = vpack.c.b16 %v1322, %v1320
        %vm1341 = vcmask 523264
        %v1343 = vsel %vm1341, %v1324, 0
        %v1346 = vsel %vm1341, %v1326, 0
        %v1349 = vsel %vm1341, %v1328, 0
        %v1352 = vsel %vm1341, %v1330, 0
        %v1355 = vsel %vm1341, %v1332, 0
        %v1358 = vsel %vm1341, %v1334, 0
        %1360 = vmatprep.subr.bf16.mxu0 %v1278
        %1361 = vmatpush1.bf16.msra.mxu0 %v1277
        %1362 = vmatprep.subr.bf16.mxu0 %v1276
        %1363 = vmatpush1.bf16.msra.mxu0 %v1275
        %1364 = vmatprep.subr.bf16.mxu0 %v1274
        %1365 = vmatpush1.bf16.msra.mxu0 %v1273
        %1366 = vmatprep.subr.bf16.mxu0 %v1272
        %1367 = vmatpush1.bf16.msra.mxu0 %v1271
        %1368 = vmatprep.subr.bf16.mxu0 %v1270
        %1369 = vmatpush1.bf16.msra.mxu0 %v1269
        %1370 = vmatprep.subr.bf16.mxu0 %v1268
        %1371 = vmatpush1.bf16.msra.mxu0 %v1267
        %1372 = vmatprep.subr.bf16.mxu0 %v1266
        %1373 = vmatpush1.bf16.msra.mxu0 %v1265
        %1374 = vmatprep.subr.bf16.mxu0 %v1264
        %1375 = vmatpush1.bf16.msra.mxu0 %v1263
        %1376 = vmatprep.subr.bf16.mxu0 0
        %1377 = vmatpush2.bf16.msra.mxu0 0
        %1378 = vmatprep.subr.bf16.mxu0 0
        %1379 = vmatpush2.bf16.msra.mxu0 0
        %1380 = vmatprep.subr.bf16.mxu0 0
        %1381 = vmatpush2.bf16.msra.mxu0 0
        %1382 = vmatprep.subr.bf16.mxu0 0
        %1383 = vmatpush2.bf16.msra.mxu0 0
        %1384 = vmatprep.subr.bf16.mxu0 %v1286
        %1385 = vmatpush2.bf16.msra.mxu0 %v1285
        %1386 = vmatprep.subr.bf16.mxu0 %v1284
        %1387 = vmatpush2.bf16.msra.mxu0 %v1283
        %1388 = vmatprep.subr.bf16.mxu0 %v1282
        %1389 = vmatpush2.bf16.msra.mxu0 %v1281
        %1390 = vmatprep.subr.bf16.mxu0 %v1280
        %1391 = vmatpush2.bf16.msra.mxu0 %v1279
        %1392 = vmatprep.mubr.bf16.mxu0 %v1343
        %1393 = vmatmul.mubr.bf16.gmra.mxu0 %v1323
        %v1394 = vpop.f32.mrf.mxu0
        %v1395 = vadd.f32 0.0, %v1394
        %v1396 = vpop.f32.mrf.mxu0
        %v1397 = vadd.f32 0.0, %v1396
        %v1398 = vpop.f32.mrf.mxu0
        %v1399 = vadd.f32 0.0, %v1398
        %v1400 = vpop.f32.mrf.mxu0
        %v1401 = vadd.f32 0.0, %v1400
        %1402 = vmatprep.mubr.bf16.mxu0 %v1346
        %1403 = vmatmul.mubr.bf16.gmra.mxu0 %v1325
        %v1404 = vpop.f32.mrf.mxu0
        %v1405 = vadd.f32 0.0, %v1404
        %v1406 = vpop.f32.mrf.mxu0
        %v1407 = vadd.f32 0.0, %v1406
        %v1408 = vpop.f32.mrf.mxu0
        %v1409 = vadd.f32 0.0, %v1408
        %v1410 = vpop.f32.mrf.mxu0
        %v1411 = vadd.f32 0.0, %v1410
        %1412 = vmatprep.mubr.bf16.mxu0 %v1349
        %1413 = vmatmul.mubr.bf16.gmra.mxu0 %v1327
        %v1414 = vpop.f32.mrf.mxu0
        %v1415 = vadd.f32 0.0, %v1414
        %v1416 = vpop.f32.mrf.mxu0
        %v1417 = vadd.f32 0.0, %v1416
        %v1418 = vpop.f32.mrf.mxu0
        %v1419 = vadd.f32 0.0, %v1418
        %v1420 = vpop.f32.mrf.mxu0
        %v1421 = vadd.f32 0.0, %v1420
        %1422 = vmatprep.mubr.bf16.mxu0 %v1352
        %1423 = vmatmul.mubr.bf16.gmra.mxu0 %v1329
        %v1424 = vpop.f32.mrf.mxu0
        %v1425 = vadd.f32 0.0, %v1424
        %v1426 = vpop.f32.mrf.mxu0
        %v1427 = vadd.f32 0.0, %v1426
        %v1428 = vpop.f32.mrf.mxu0
        %v1429 = vadd.f32 0.0, %v1428
        %v1430 = vpop.f32.mrf.mxu0
        %v1431 = vadd.f32 0.0, %v1430
        %1432 = vmatprep.mubr.bf16.mxu0 %v1355
        %1433 = vmatmul.mubr.bf16.gmra.mxu0 %v1331
        %v1434 = vpop.f32.mrf.mxu0
        %v1435 = vadd.f32 0.0, %v1434
        %v1436 = vpop.f32.mrf.mxu0
        %v1437 = vadd.f32 0.0, %v1436
        %v1438 = vpop.f32.mrf.mxu0
        %v1439 = vadd.f32 0.0, %v1438
        %v1440 = vpop.f32.mrf.mxu0
        %v1441 = vadd.f32 0.0, %v1440
        %1442 = vmatprep.mubr.bf16.mxu0 %v1358
        %1443 = vmatmul.mubr.bf16.gmra.mxu0 %v1333
        %v1444 = vpop.f32.mrf.mxu0
        %v1445 = vadd.f32 0.0, %v1444
        %v1446 = vpop.f32.mrf.mxu0
        %v1447 = vadd.f32 0.0, %v1446
        %v1448 = vpop.f32.mrf.mxu0
        %v1449 = vadd.f32 0.0, %v1448
        %v1450 = vpop.f32.mrf.mxu0
        %v1451 = vadd.f32 0.0, %v1450
        %1452 = vdwg.mxu0
        %vm1453 = vcmp.gt.f32.partialorder %v1395, 0.0
        %vm1454 = vcmp.gt.f32.partialorder %v1397, 0.0
        %vm1455 = vcmp.gt.f32.partialorder %v1399, 0.0
        %vm1456 = vcmp.gt.f32.partialorder %v1401, 0.0
        %vm1457 = vcmp.gt.f32.partialorder %v1405, 0.0
        %vm1458 = vcmp.gt.f32.partialorder %v1407, 0.0
        %vm1459 = vcmp.gt.f32.partialorder %v1409, 0.0
        %vm1460 = vcmp.gt.f32.partialorder %v1411, 0.0
        %vm1461 = vcmp.gt.f32.partialorder %v1415, 0.0
        %vm1462 = vcmp.gt.f32.partialorder %v1417, 0.0
        %vm1463 = vcmp.gt.f32.partialorder %v1419, 0.0
        %vm1464 = vcmp.gt.f32.partialorder %v1421, 0.0
        %vm1465 = vcmp.gt.f32.partialorder %v1425, 0.0
        %vm1466 = vcmp.gt.f32.partialorder %v1427, 0.0
        %vm1467 = vcmp.gt.f32.partialorder %v1429, 0.0
        %vm1468 = vcmp.gt.f32.partialorder %v1431, 0.0
        %vm1469 = vcmp.gt.f32.partialorder %v1435, 0.0
        %vm1470 = vcmp.gt.f32.partialorder %v1437, 0.0
        %vm1471 = vcmp.gt.f32.partialorder %v1439, 0.0
        %vm1472 = vcmp.gt.f32.partialorder %v1441, 0.0
        %vm1473 = vcmp.gt.f32.partialorder %v1445, 0.0
        %vm1474 = vcmp.gt.f32.partialorder %v1447, 0.0
        %vm1475 = vcmp.gt.f32.partialorder %v1449, 0.0
        %vm1476 = vcmp.gt.f32.partialorder %v1451, 0.0
        %v1477 = vmul.f32 %v1395, 1.050701
        %v1478 = vmul.f32 %v1397, 1.050701
        %v1479 = vmul.f32 %v1399, 1.050701
        %v1480 = vmul.f32 %v1401, 1.050701
        %v1481 = vmul.f32 %v1405, 1.050701
        %v1482 = vmul.f32 %v1407, 1.050701
        %v1483 = vmul.f32 %v1409, 1.050701
        %v1484 = vmul.f32 %v1411, 1.050701
        %v1485 = vmul.f32 %v1415, 1.050701
        %v1486 = vmul.f32 %v1417, 1.050701
        %v1487 = vmul.f32 %v1419, 1.050701
        %v1488 = vmul.f32 %v1421, 1.050701
        %v1489 = vmul.f32 %v1425, 1.050701
        %v1490 = vmul.f32 %v1427, 1.050701
        %v1491 = vmul.f32 %v1429, 1.050701
        %v1492 = vmul.f32 %v1431, 1.050701
        %v1493 = vmul.f32 %v1435, 1.050701
        %v1494 = vmul.f32 %v1437, 1.050701
        %v1495 = vmul.f32 %v1439, 1.050701
        %v1496 = vmul.f32 %v1441, 1.050701
        %v1497 = vmul.f32 %v1445, 1.050701
        %v1498 = vmul.f32 %v1447, 1.050701
        %v1499 = vmul.f32 %v1449, 1.050701
        %v1500 = vmul.f32 %v1451, 1.050701
        %v1501 = vmul.f32 %v1395, 1.442695
        %v1502 = vpow.pop %v1501
        %v1503 = vmul.f32 %v1397, 1.442695
        %v1504 = vpow.pop %v1503
        %v1505 = vmul.f32 %v1399, 1.442695
        %v1506 = vpow.pop %v1505
        %v1507 = vmul.f32 %v1401, 1.442695
        %v1508 = vpow.pop %v1507
        %v1509 = vmul.f32 %v1405, 1.442695
        %v1510 = vpow.pop %v1509
        %v1511 = vmul.f32 %v1407, 1.442695
        %v1512 = vpow.pop %v1511
        %v1513 = vmul.f32 %v1409, 1.442695
        %v1514 = vpow.pop %v1513
        %v1515 = vmul.f32 %v1411, 1.442695
        %v1516 = vpow.pop %v1515
        %v1517 = vmul.f32 %v1415, 1.442695
        %v1518 = vpow.pop %v1517
        %v1519 = vmul.f32 %v1417, 1.442695
        %v1520 = vpow.pop %v1519
        %v1521 = vmul.f32 %v1419, 1.442695
        %v1522 = vpow.pop %v1521
        %v1523 = vmul.f32 %v1421, 1.442695
        %v1524 = vpow.pop %v1523
        %v1525 = vmul.f32 %v1425, 1.442695
        %v1526 = vpow.pop %v1525
        %v1527 = vmul.f32 %v1427, 1.442695
        %v1528 = vpow.pop %v1527
        %v1529 = vmul.f32 %v1429, 1.442695
        %v1530 = vpow.pop %v1529
        %v1531 = vmul.f32 %v1431, 1.442695
        %v1532 = vpow.pop %v1531
        %v1533 = vmul.f32 %v1435, 1.442695
        %v1534 = vpow.pop %v1533
        %v1535 = vmul.f32 %v1437, 1.442695
        %v1536 = vpow.pop %v1535
        %v1537 = vmul.f32 %v1439, 1.442695
        %v1538 = vpow.pop %v1537
        %v1539 = vmul.f32 %v1441, 1.442695
        %v1540 = vpow.pop %v1539
        %v1541 = vmul.f32 %v1445, 1.442695
        %v1542 = vpow.pop %v1541
        %v1543 = vmul.f32 %v1447, 1.442695
        %v1544 = vpow.pop %v1543
        %v1545 = vmul.f32 %v1449, 1.442695
        %v1546 = vpow.pop %v1545
        %v1547 = vmul.f32 %v1451, 1.442695
        %v1548 = vpow.pop %v1547
        %v1549 = vmul.f32 %v1502, 1.7580993
        %v1550 = vmul.f32 %v1504, 1.7580993
        %v1551 = vmul.f32 %v1506, 1.7580993
        %v1552 = vmul.f32 %v1508, 1.7580993
        %v1553 = vmul.f32 %v1510, 1.7580993
        %v1554 = vmul.f32 %v1512, 1.7580993
        %v1555 = vmul.f32 %v1514, 1.7580993
        %v1556 = vmul.f32 %v1516, 1.7580993
        %v1557 = vmul.f32 %v1518, 1.7580993
        %v1558 = vmul.f32 %v1520, 1.7580993
        %v1559 = vmul.f32 %v1522, 1.7580993
        %v1560 = vmul.f32 %v1524, 1.7580993
        %v1561 = vmul.f32 %v1526, 1.7580993
        %v1562 = vmul.f32 %v1528, 1.7580993
        %v1563 = vmul.f32 %v1530, 1.7580993
        %v1564 = vmul.f32 %v1532, 1.7580993
        %v1565 = vmul.f32 %v1534, 1.7580993
        %v1566 = vmul.f32 %v1536, 1.7580993
        %v1567 = vmul.f32 %v1538, 1.7580993
        %v1568 = vmul.f32 %v1540, 1.7580993
        %v1569 = vmul.f32 %v1542, 1.7580993
        %v1570 = vmul.f32 %v1544, 1.7580993
        %v1571 = vmul.f32 %v1546, 1.7580993
        %v1572 = vmul.f32 %v1548, 1.7580993
        %v1573 = vsub.f32 %v1549, 1.7580993
        %v1574 = vsub.f32 %v1550, 1.7580993
        %v1575 = vsub.f32 %v1551, 1.7580993
        %v1576 = vsub.f32 %v1552, 1.7580993
        %v1577 = vsub.f32 %v1553, 1.7580993
        %v1578 = vsub.f32 %v1554, 1.7580993
        %v1579 = vsub.f32 %v1555, 1.7580993
        %v1580 = vsub.f32 %v1556, 1.7580993
        %v1581 = vsub.f32 %v1557, 1.7580993
        %v1582 = vsub.f32 %v1558, 1.7580993
        %v1583 = vsub.f32 %v1559, 1.7580993
        %v1584 = vsub.f32 %v1560, 1.7580993
        %v1585 = vsub.f32 %v1561, 1.7580993
        %v1586 = vsub.f32 %v1562, 1.7580993
        %v1587 = vsub.f32 %v1563, 1.7580993
        %v1588 = vsub.f32 %v1564, 1.7580993
        %v1589 = vsub.f32 %v1565, 1.7580993
        %v1590 = vsub.f32 %v1566, 1.7580993
        %v1591 = vsub.f32 %v1567, 1.7580993
        %v1592 = vsub.f32 %v1568, 1.7580993
        %v1593 = vsub.f32 %v1569, 1.7580993
        %v1594 = vsub.f32 %v1570, 1.7580993
        %v1595 = vsub.f32 %v1571, 1.7580993
        %v1596 = vsub.f32 %v1572, 1.7580993
        %v1597 = vsel %vm1453, %v1477, %v1573
        %v1598 = vsel %vm1454, %v1478, %v1574
        %v1599 = vsel %vm1455, %v1479, %v1575
        %v1600 = vsel %vm1456, %v1480, %v1576
        %v1601 = vsel %vm1457, %v1481, %v1577
        %v1602 = vsel %vm1458, %v1482, %v1578
        %v1603 = vsel %vm1459, %v1483, %v1579
        %v1604 = vsel %vm1460, %v1484, %v1580
        %v1605 = vsel %vm1461, %v1485, %v1581
        %v1606 = vsel %vm1462, %v1486, %v1582
        %v1607 = vsel %vm1463, %v1487, %v1583
        %v1608 = vsel %vm1464, %v1488, %v1584
        %v1609 = vsel %vm1465, %v1489, %v1585
        %v1610 = vsel %vm1466, %v1490, %v1586
        %v1611 = vsel %vm1467, %v1491, %v1587
        %v1612 = vsel %vm1468, %v1492, %v1588
        %v1613 = vsel %vm1469, %v1493, %v1589
        %v1614 = vsel %vm1470, %v1494, %v1590
        %v1615 = vsel %vm1471, %v1495, %v1591
        %v1616 = vsel %vm1472, %v1496, %v1592
        %v1617 = vsel %vm1473, %v1497, %v1593
        %v1618 = vsel %vm1474, %v1498, %v1594
        %v1619 = vsel %vm1475, %v1499, %v1595
        %v1620 = vsel %vm1476, %v1500, %v1596
        %v1621 = vld [vmem:[%s4] sm:$0xf]
        %v1622 = vld [vmem:[%s4 + $0x4] sm:$0xf]
        %v1623 = vld [vmem:[%s4 + $0x8] sm:$0xf]
        %v1624 = vld [vmem:[%s4 + $0xc] sm:$0xf]
        %v1625 = vld [vmem:[%s4 + $0x10] sm:$0xf]
        %v1626 = vld [vmem:[%s4 + $0x14] sm:$0xf]
        %v1627 = vld [vmem:[%s4 + $0x18] sm:$0xf]
        %v1628 = vld [vmem:[%s4 + $0x1c] sm:$0xf]
        %v1629 = vpack.c.bf16 %v1599, %v1597
        %v1630 = vpack.c.bf16 %v1600, %v1598
        %v1631 = vpack.c.bf16 %v1603, %v1601
        %v1632 = vpack.c.bf16 %v1604, %v1602
        %v1633 = vpack.c.bf16 %v1607, %v1605
        %v1634 = vpack.c.bf16 %v1608, %v1606
        %v1635 = vpack.c.bf16 %v1611, %v1609
        %v1636 = vpack.c.bf16 %v1612, %v1610
        %v1637 = vpack.c.bf16 %v1615, %v1613
        %v1638 = vpack.c.bf16 %v1616, %v1614
        %v1639 = vpack.c.bf16 %v1619, %v1617
        %v1640 = vpack.c.bf16 %v1620, %v1618
        %v1649 = vunpack.c.l.b16 %v1621
        %v1650 = vunpack.c.l.b16 %v1622
        %v1651 = vunpack.c.l.b16 %v1623
        %v1652 = vunpack.c.l.b16 %v1624
        %v1653 = vunpack.c.l.b16 %v1625
        %v1654 = vunpack.c.l.b16 %v1626
        %v1655 = vunpack.c.l.b16 %v1627
        %v1656 = vunpack.c.l.b16 %v1628
        %v1657 = vpack.c.b16 %v1650, %v1649
        %v1658 = vpack.c.b16 %v1652, %v1651
        %v1659 = vpack.c.b16 %v1654, %v1653
        %v1660 = vpack.c.b16 %v1656, %v1655
        %vm1661 = vcmask 785408
        %v1663 = vsel %vm1661, %v1657, 0
        %v1666 = vsel %vm1661, %v1658, 0
        %v1669 = vsel %vm1661, %v1659, 0
        %v1672 = vsel %vm1661, %v1660, 0
        %1674 = vmatprep.subr.bf16.mxu0 0
        %1675 = vmatpush1.bf16.msra.mxu0 0
        %1676 = vmatprep.subr.bf16.mxu0 0
        %1677 = vmatpush1.bf16.msra.mxu0 0
        %1678 = vmatprep.subr.bf16.mxu0 %v1640
        %1679 = vmatpush1.bf16.msra.mxu0 %v1639
        %1680 = vmatprep.subr.bf16.mxu0 %v1638
        %1681 = vmatpush1.bf16.msra.mxu0 %v1637
        %1682 = vmatprep.subr.bf16.mxu0 %v1636
        %1683 = vmatpush1.bf16.msra.mxu0 %v1635
        %1684 = vmatprep.subr.bf16.mxu0 %v1634
        %1685 = vmatpush1.bf16.msra.mxu0 %v1633
        %1686 = vmatprep.subr.bf16.mxu0 %v1632
        %1687 = vmatpush1.bf16.msra.mxu0 %v1631
        %1688 = vmatprep.subr.bf16.mxu0 %v1630
        %1689 = vmatpush1.bf16.msra.mxu0 %v1629
        %1690 = vmatprep.subr.bf16.mxu0 0
        %1691 = vmatpush2.bf16.msra.mxu0 0
        %1692 = vmatprep.subr.bf16.mxu0 0
        %1693 = vmatpush2.bf16.msra.mxu0 0
        %1694 = vmatprep.subr.bf16.mxu0 0
        %1695 = vmatpush2.bf16.msra.mxu0 0
        %1696 = vmatprep.subr.bf16.mxu0 0
        %1697 = vmatpush2.bf16.msra.mxu0 0
        %1698 = vmatprep.subr.bf16.mxu0 0
        %1699 = vmatpush2.bf16.msra.mxu0 0
        %1700 = vmatprep.subr.bf16.mxu0 0
        %1701 = vmatpush2.bf16.msra.mxu0 0
        %1702 = vmatprep.subr.bf16.mxu0 0
        %1703 = vmatpush2.bf16.msra.mxu0 0
        %1704 = vmatprep.subr.bf16.mxu0 0
        %1705 = vmatpush2.bf16.msra.mxu0 0
        %1706 = vmatprep.mubr.bf16.mxu0 0
        %1707 = vmatmul.mubr.bf16.gmra.mxu0 %v1663
        %v1708 = vpop.f32.mrf.mxu0
        %v1709 = vadd.f32 0.0, %v1708
        %v1710 = vpop.f32.mrf.mxu0
        %v1711 = vadd.f32 0.0, %v1710
        %v1712 = vpop.f32.mrf.mxu0
        %v1713 = vadd.f32 0.0, %v1712
        %v1714 = vpop.f32.mrf.mxu0
        %v1715 = vadd.f32 0.0, %v1714
        %1716 = vmatprep.mubr.bf16.mxu0 0
        %1717 = vmatmul.mubr.bf16.gmra.mxu0 %v1666
        %v1718 = vpop.f32.mrf.mxu0
        %v1719 = vadd.f32 0.0, %v1718
        %v1720 = vpop.f32.mrf.mxu0
        %v1721 = vadd.f32 0.0, %v1720
        %v1722 = vpop.f32.mrf.mxu0
        %v1723 = vadd.f32 0.0, %v1722
        %v1724 = vpop.f32.mrf.mxu0
        %v1725 = vadd.f32 0.0, %v1724
        %1726 = vmatprep.mubr.bf16.mxu0 0
        %1727 = vmatmul.mubr.bf16.gmra.mxu0 %v1669
        %v1728 = vpop.f32.mrf.mxu0
        %v1729 = vadd.f32 0.0, %v1728
        %v1730 = vpop.f32.mrf.mxu0
        %v1731 = vadd.f32 0.0, %v1730
        %v1732 = vpop.f32.mrf.mxu0
        %v1733 = vadd.f32 0.0, %v1732
        %v1734 = vpop.f32.mrf.mxu0
        %v1735 = vadd.f32 0.0, %v1734
        %1736 = vmatprep.mubr.bf16.mxu0 0
        %1737 = vmatmul.mubr.bf16.gmra.mxu0 %v1672
        %v1738 = vpop.f32.mrf.mxu0
        %v1739 = vadd.f32 0.0, %v1738
        %v1740 = vpop.f32.mrf.mxu0
        %v1741 = vadd.f32 0.0, %v1740
        %v1742 = vpop.f32.mrf.mxu0
        %v1743 = vadd.f32 0.0, %v1742
        %v1744 = vpop.f32.mrf.mxu0
        %v1745 = vadd.f32 0.0, %v1744
        %1746 = vdwg.mxu0
        %vm1747 = vcmp.gt.f32.partialorder %v1709, 0.0
        %vm1748 = vcmp.gt.f32.partialorder %v1711, 0.0
        %vm1749 = vcmp.gt.f32.partialorder %v1713, 0.0
        %vm1750 = vcmp.gt.f32.partialorder %v1715, 0.0
        %vm1751 = vcmp.gt.f32.partialorder %v1719, 0.0
        %vm1752 = vcmp.gt.f32.partialorder %v1721, 0.0
        %vm1753 = vcmp.gt.f32.partialorder %v1723, 0.0
        %vm1754 = vcmp.gt.f32.partialorder %v1725, 0.0
        %vm1755 = vcmp.gt.f32.partialorder %v1729, 0.0
        %vm1756 = vcmp.gt.f32.partialorder %v1731, 0.0
        %vm1757 = vcmp.gt.f32.partialorder %v1733, 0.0
        %vm1758 = vcmp.gt.f32.partialorder %v1735, 0.0
        %vm1759 = vcmp.gt.f32.partialorder %v1739, 0.0
        %vm1760 = vcmp.gt.f32.partialorder %v1741, 0.0
        %vm1761 = vcmp.gt.f32.partialorder %v1743, 0.0
        %vm1762 = vcmp.gt.f32.partialorder %v1745, 0.0
        %v1763 = vmul.f32 %v1709, 1.050701
        %v1764 = vmul.f32 %v1711, 1.050701
        %v1765 = vmul.f32 %v1713, 1.050701
        %v1766 = vmul.f32 %v1715, 1.050701
        %v1767 = vmul.f32 %v1719, 1.050701
        %v1768 = vmul.f32 %v1721, 1.050701
        %v1769 = vmul.f32 %v1723, 1.050701
        %v1770 = vmul.f32 %v1725, 1.050701
        %v1771 = vmul.f32 %v1729, 1.050701
        %v1772 = vmul.f32 %v1731, 1.050701
        %v1773 = vmul.f32 %v1733, 1.050701
        %v1774 = vmul.f32 %v1735, 1.050701
        %v1775 = vmul.f32 %v1739, 1.050701
        %v1776 = vmul.f32 %v1741, 1.050701
        %v1777 = vmul.f32 %v1743, 1.050701
        %v1778 = vmul.f32 %v1745, 1.050701
        %v1779 = vmul.f32 %v1709, 1.442695
        %v1780 = vpow.pop %v1779
        %v1781 = vmul.f32 %v1711, 1.442695
        %v1782 = vpow.pop %v1781
        %v1783 = vmul.f32 %v1713, 1.442695
        %v1784 = vpow.pop %v1783
        %v1785 = vmul.f32 %v1715, 1.442695
        %v1786 = vpow.pop %v1785
        %v1787 = vmul.f32 %v1719, 1.442695
        %v1788 = vpow.pop %v1787
        %v1789 = vmul.f32 %v1721, 1.442695
        %v1790 = vpow.pop %v1789
        %v1791 = vmul.f32 %v1723, 1.442695
        %v1792 = vpow.pop %v1791
        %v1793 = vmul.f32 %v1725, 1.442695
        %v1794 = vpow.pop %v1793
        %v1795 = vmul.f32 %v1729, 1.442695
        %v1796 = vpow.pop %v1795
        %v1797 = vmul.f32 %v1731, 1.442695
        %v1798 = vpow.pop %v1797
        %v1799 = vmul.f32 %v1733, 1.442695
        %v1800 = vpow.pop %v1799
        %v1801 = vmul.f32 %v1735, 1.442695
        %v1802 = vpow.pop %v1801
        %v1803 = vmul.f32 %v1739, 1.442695
        %v1804 = vpow.pop %v1803
        %v1805 = vmul.f32 %v1741, 1.442695
        %v1806 = vpow.pop %v1805
        %v1807 = vmul.f32 %v1743, 1.442695
        %v1808 = vpow.pop %v1807
        %v1809 = vmul.f32 %v1745, 1.442695
        %v1810 = vpow.pop %v1809
        %v1811 = vmul.f32 %v1780, 1.7580993
        %v1812 = vmul.f32 %v1782, 1.7580993
        %v1813 = vmul.f32 %v1784, 1.7580993
        %v1814 = vmul.f32 %v1786, 1.7580993
        %v1815 = vmul.f32 %v1788, 1.7580993
        %v1816 = vmul.f32 %v1790, 1.7580993
        %v1817 = vmul.f32 %v1792, 1.7580993
        %v1818 = vmul.f32 %v1794, 1.7580993
        %v1819 = vmul.f32 %v1796, 1.7580993
        %v1820 = vmul.f32 %v1798, 1.7580993
        %v1821 = vmul.f32 %v1800, 1.7580993
        %v1822 = vmul.f32 %v1802, 1.7580993
        %v1823 = vmul.f32 %v1804, 1.7580993
        %v1824 = vmul.f32 %v1806, 1.7580993
        %v1825 = vmul.f32 %v1808, 1.7580993
        %v1826 = vmul.f32 %v1810, 1.7580993
        %v1827 = vsub.f32 %v1811, 1.7580993
        %v1828 = vsub.f32 %v1812, 1.7580993
        %v1829 = vsub.f32 %v1813, 1.7580993
        %v1830 = vsub.f32 %v1814, 1.7580993
        %v1831 = vsub.f32 %v1815, 1.7580993
        %v1832 = vsub.f32 %v1816, 1.7580993
        %v1833 = vsub.f32 %v1817, 1.7580993
        %v1834 = vsub.f32 %v1818, 1.7580993
        %v1835 = vsub.f32 %v1819, 1.7580993
        %v1836 = vsub.f32 %v1820, 1.7580993
        %v1837 = vsub.f32 %v1821, 1.7580993
        %v1838 = vsub.f32 %v1822, 1.7580993
        %v1839 = vsub.f32 %v1823, 1.7580993
        %v1840 = vsub.f32 %v1824, 1.7580993
        %v1841 = vsub.f32 %v1825, 1.7580993
        %v1842 = vsub.f32 %v1826, 1.7580993
        %v1843 = vsel %vm1747, %v1763, %v1827
        %v1844 = vsel %vm1748, %v1764, %v1828
        %v1845 = vsel %vm1749, %v1765, %v1829
        %v1846 = vsel %vm1750, %v1766, %v1830
        %v1847 = vsel %vm1751, %v1767, %v1831
        %v1848 = vsel %vm1752, %v1768, %v1832
        %v1849 = vsel %vm1753, %v1769, %v1833
        %v1850 = vsel %vm1754, %v1770, %v1834
        %v1851 = vsel %vm1755, %v1771, %v1835
        %v1852 = vsel %vm1756, %v1772, %v1836
        %v1853 = vsel %vm1757, %v1773, %v1837
        %v1854 = vsel %vm1758, %v1774, %v1838
        %v1855 = vsel %vm1759, %v1775, %v1839
        %v1856 = vsel %vm1760, %v1776, %v1840
        %v1857 = vsel %vm1761, %v1777, %v1841
        %v1858 = vsel %vm1762, %v1778, %v1842
        %v1859 = vpack.c.bf16 %v1845, %v1843
        %v1860 = vpack.c.bf16 %v1846, %v1844
        %v1861 = vpack.c.bf16 %v1849, %v1847
        %v1862 = vpack.c.bf16 %v1850, %v1848
        %v1863 = vpack.c.bf16 %v1853, %v1851
        %v1864 = vpack.c.bf16 %v1854, %v1852
        %v1865 = vpack.c.bf16 %v1857, %v1855
        %v1866 = vpack.c.bf16 %v1858, %v1856
        %v1867 = vunpack.c.l.bf16 %v337
        %v1868 = vunpack.c.l.bf16 %v338
        %v1869 = vunpack.c.l.bf16 %v339
        %v1870 = vunpack.c.l.bf16 %v340
        %v1871 = vunpack.c.l.bf16 %v341
        %v1872 = vunpack.c.l.bf16 %v342
        %v1873 = vunpack.c.l.bf16 %v343
        %v1874 = vunpack.c.l.bf16 %v344
        %v1875 = vunpack.c.l.bf16 %v345
        %v1876 = vunpack.c.l.bf16 %v346
        %v1877 = vunpack.c.l.bf16 %v347
        %v1878 = vunpack.c.l.bf16 %v348
        %v1879 = vunpack.c.l.bf16 %v349
        %v1880 = vunpack.c.l.bf16 %v350
        %v1881 = vunpack.c.l.bf16 %v351
        %v1882 = vunpack.c.l.bf16 %v352
        %v1883 = vunpack.c.l.bf16 %v353
        %v1884 = vunpack.c.l.bf16 %v354
        %v1885 = vunpack.c.l.bf16 %v355
        %v1886 = vunpack.c.l.bf16 %v356
        %v1887 = vunpack.c.l.bf16 %v357
        %v1888 = vunpack.c.l.bf16 %v358
        %v1889 = vunpack.c.l.bf16 %v359
        %v1890 = vunpack.c.l.bf16 %v360
        %v1891 = vunpack.c.l.bf16 %v361
        %v1892 = vunpack.c.l.bf16 %v362
        %v1893 = vunpack.c.l.bf16 %v363
        %v1894 = vunpack.c.l.bf16 %v364
        %v1895 = vunpack.c.l.bf16 %v365
        %v1896 = vunpack.c.l.bf16 %v366
        %v1897 = vunpack.c.l.bf16 %v367
        %v1898 = vunpack.c.l.bf16 %v368
        %vm1899 = vcmp.gt.f32.partialorder %v1867, 0.0
        %vm1900 = vcmp.gt.f32.partialorder %v1868, 0.0
        %vm1901 = vcmp.gt.f32.partialorder %v1869, 0.0
        %vm1902 = vcmp.gt.f32.partialorder %v1870, 0.0
        %vm1903 = vcmp.gt.f32.partialorder %v1871, 0.0
        %vm1904 = vcmp.gt.f32.partialorder %v1872, 0.0
        %vm1905 = vcmp.gt.f32.partialorder %v1873, 0.0
        %vm1906 = vcmp.gt.f32.partialorder %v1874, 0.0
        %vm1907 = vcmp.gt.f32.partialorder %v1875, 0.0
        %vm1908 = vcmp.gt.f32.partialorder %v1876, 0.0
        %vm1909 = vcmp.gt.f32.partialorder %v1877, 0.0
        %vm1910 = vcmp.gt.f32.partialorder %v1878, 0.0
        %vm1911 = vcmp.gt.f32.partialorder %v1879, 0.0
        %vm1912 = vcmp.gt.f32.partialorder %v1880, 0.0
        %vm1913 = vcmp.gt.f32.partialorder %v1881, 0.0
        %vm1914 = vcmp.gt.f32.partialorder %v1882, 0.0
        %vm1915 = vcmp.gt.f32.partialorder %v1883, 0.0
        %vm1916 = vcmp.gt.f32.partialorder %v1884, 0.0
        %vm1917 = vcmp.gt.f32.partialorder %v1885, 0.0
        %vm1918 = vcmp.gt.f32.partialorder %v1886, 0.0
        %vm1919 = vcmp.gt.f32.partialorder %v1887, 0.0
        %vm1920 = vcmp.gt.f32.partialorder %v1888, 0.0
        %vm1921 = vcmp.gt.f32.partialorder %v1889, 0.0
        %vm1922 = vcmp.gt.f32.partialorder %v1890, 0.0
        %vm1923 = vcmp.gt.f32.partialorder %v1891, 0.0
        %vm1924 = vcmp.gt.f32.partialorder %v1892, 0.0
        %vm1925 = vcmp.gt.f32.partialorder %v1893, 0.0
        %vm1926 = vcmp.gt.f32.partialorder %v1894, 0.0
        %vm1927 = vcmp.gt.f32.partialorder %v1895, 0.0
        %vm1928 = vcmp.gt.f32.partialorder %v1896, 0.0
        %vm1929 = vcmp.gt.f32.partialorder %v1897, 0.0
        %vm1930 = vcmp.gt.f32.partialorder %v1898, 0.0
        %v1931 = vmul.f32 %v1867, 1.050701
        %v1932 = vmul.f32 %v1868, 1.050701
        %v1933 = vmul.f32 %v1869, 1.050701
        %v1934 = vmul.f32 %v1870, 1.050701
        %v1935 = vmul.f32 %v1871, 1.050701
        %v1936 = vmul.f32 %v1872, 1.050701
        %v1937 = vmul.f32 %v1873, 1.050701
        %v1938 = vmul.f32 %v1874, 1.050701
        %v1939 = vmul.f32 %v1875, 1.050701
        %v1940 = vmul.f32 %v1876, 1.050701
        %v1941 = vmul.f32 %v1877, 1.050701
        %v1942 = vmul.f32 %v1878, 1.050701
        %v1943 = vmul.f32 %v1879, 1.050701
        %v1944 = vmul.f32 %v1880, 1.050701
        %v1945 = vmul.f32 %v1881, 1.050701
        %v1946 = vmul.f32 %v1882, 1.050701
        %v1947 = vmul.f32 %v1883, 1.050701
        %v1948 = vmul.f32 %v1884, 1.050701
        %v1949 = vmul.f32 %v1885, 1.050701
        %v1950 = vmul.f32 %v1886, 1.050701
        %v1951 = vmul.f32 %v1887, 1.050701
        %v1952 = vmul.f32 %v1888, 1.050701
        %v1953 = vmul.f32 %v1889, 1.050701
        %v1954 = vmul.f32 %v1890, 1.050701
        %v1955 = vmul.f32 %v1891, 1.050701
        %v1956 = vmul.f32 %v1892, 1.050701
        %v1957 = vmul.f32 %v1893, 1.050701
        %v1958 = vmul.f32 %v1894, 1.050701
        %v1959 = vmul.f32 %v1895, 1.050701
        %v1960 = vmul.f32 %v1896, 1.050701
        %v1961 = vmul.f32 %v1897, 1.050701
        %v1962 = vmul.f32 %v1898, 1.050701
        %v1963 = vmul.f32 %v1867, 1.442695
        %v1964 = vpow.pop %v1963
        %v1965 = vmul.f32 %v1868, 1.442695
        %v1966 = vpow.pop %v1965
        %v1967 = vmul.f32 %v1869, 1.442695
        %v1968 = vpow.pop %v1967
        %v1969 = vmul.f32 %v1870, 1.442695
        %v1970 = vpow.pop %v1969
        %v1971 = vmul.f32 %v1871, 1.442695
        %v1972 = vpow.pop %v1971
        %v1973 = vmul.f32 %v1872, 1.442695
        %v1974 = vpow.pop %v1973
        %v1975 = vmul.f32 %v1873, 1.442695
        %v1976 = vpow.pop %v1975
        %v1977 = vmul.f32 %v1874, 1.442695
        %v1978 = vpow.pop %v1977
        %v1979 = vmul.f32 %v1875, 1.442695
        %v1980 = vpow.pop %v1979
        %v1981 = vmul.f32 %v1876, 1.442695
        %v1982 = vpow.pop %v1981
        %v1983 = vmul.f32 %v1877, 1.442695
        %v1984 = vpow.pop %v1983
        %v1985 = vmul.f32 %v1878, 1.442695
        %v1986 = vpow.pop %v1985
        %v1987 = vmul.f32 %v1879, 1.442695
        %v1988 = vpow.pop %v1987
        %v1989 = vmul.f32 %v1880, 1.442695
        %v1990 = vpow.pop %v1989
        %v1991 = vmul.f32 %v1881, 1.442695
        %v1992 = vpow.pop %v1991
        %v1993 = vmul.f32 %v1882, 1.442695
        %v1994 = vpow.pop %v1993
        %v1995 = vmul.f32 %v1883, 1.442695
        %v1996 = vpow.pop %v1995
        %v1997 = vmul.f32 %v1884, 1.442695
        %v1998 = vpow.pop %v1997
        %v1999 = vmul.f32 %v1885, 1.442695
        %v2000 = vpow.pop %v1999
        %v2001 = vmul.f32 %v1886, 1.442695
        %v2002 = vpow.pop %v2001
        %v2003 = vmul.f32 %v1887, 1.442695
        %v2004 = vpow.pop %v2003
        %v2005 = vmul.f32 %v1888, 1.442695
        %v2006 = vpow.pop %v2005
        %v2007 = vmul.f32 %v1889, 1.442695
        %v2008 = vpow.pop %v2007
        %v2009 = vmul.f32 %v1890, 1.442695
        %v2010 = vpow.pop %v2009
        %v2011 = vmul.f32 %v1891, 1.442695
        %v2012 = vpow.pop %v2011
        %v2013 = vmul.f32 %v1892, 1.442695
        %v2014 = vpow.pop %v2013
        %v2015 = vmul.f32 %v1893, 1.442695
        %v2016 = vpow.pop %v2015
        %v2017 = vmul.f32 %v1894, 1.442695
        %v2018 = vpow.pop %v2017
        %v2019 = vmul.f32 %v1895, 1.442695
        %v2020 = vpow.pop %v2019
        %v2021 = vmul.f32 %v1896, 1.442695
        %v2022 = vpow.pop %v2021
        %v2023 = vmul.f32 %v1897, 1.442695
        %v2024 = vpow.pop %v2023
        %v2025 = vmul.f32 %v1898, 1.442695
        %v2026 = vpow.pop %v2025
        %v2027 = vmul.f32 %v1964, 1.7580993
        %v2028 = vmul.f32 %v1966, 1.7580993
        %v2029 = vmul.f32 %v1968, 1.7580993
        %v2030 = vmul.f32 %v1970, 1.7580993
        %v2031 = vmul.f32 %v1972, 1.7580993
        %v2032 = vmul.f32 %v1974, 1.7580993
        %v2033 = vmul.f32 %v1976, 1.7580993
        %v2034 = vmul.f32 %v1978, 1.7580993
        %v2035 = vmul.f32 %v1980, 1.7580993
        %v2036 = vmul.f32 %v1982, 1.7580993
        %v2037 = vmul.f32 %v1984, 1.7580993
        %v2038 = vmul.f32 %v1986, 1.7580993
        %v2039 = vmul.f32 %v1988, 1.7580993
        %v2040 = vmul.f32 %v1990, 1.7580993
        %v2041 = vmul.f32 %v1992, 1.7580993
        %v2042 = vmul.f32 %v1994, 1.7580993
        %v2043 = vmul.f32 %v1996, 1.7580993
        %v2044 = vmul.f32 %v1998, 1.7580993
        %v2045 = vmul.f32 %v2000, 1.7580993
        %v2046 = vmul.f32 %v2002, 1.7580993
        %v2047 = vmul.f32 %v2004, 1.7580993
        %v2048 = vmul.f32 %v2006, 1.7580993
        %v2049 = vmul.f32 %v2008, 1.7580993
        %v2050 = vmul.f32 %v2010, 1.7580993
        %v2051 = vmul.f32 %v2012, 1.7580993
        %v2052 = vmul.f32 %v2014, 1.7580993
        %v2053 = vmul.f32 %v2016, 1.7580993
        %v2054 = vmul.f32 %v2018, 1.7580993
        %v2055 = vmul.f32 %v2020, 1.7580993
        %v2056 = vmul.f32 %v2022, 1.7580993
        %v2057 = vmul.f32 %v2024, 1.7580993
        %v2058 = vmul.f32 %v2026, 1.7580993
        %v2059 = vsub.f32 %v2027, 1.7580993
        %v2060 = vsub.f32 %v2028, 1.7580993
        %v2061 = vsub.f32 %v2029, 1.7580993
        %v2062 = vsub.f32 %v2030, 1.7580993
        %v2063 = vsub.f32 %v2031, 1.7580993
        %v2064 = vsub.f32 %v2032, 1.7580993
        %v2065 = vsub.f32 %v2033, 1.7580993
        %v2066 = vsub.f32 %v2034, 1.7580993
        %v2067 = vsub.f32 %v2035, 1.7580993
        %v2068 = vsub.f32 %v2036, 1.7580993
        %v2069 = vsub.f32 %v2037, 1.7580993
        %v2070 = vsub.f32 %v2038, 1.7580993
        %v2071 = vsub.f32 %v2039, 1.7580993
        %v2072 = vsub.f32 %v2040, 1.7580993
        %v2073 = vsub.f32 %v2041, 1.7580993
        %v2074 = vsub.f32 %v2042, 1.7580993
        %v2075 = vsub.f32 %v2043, 1.7580993
        %v2076 = vsub.f32 %v2044, 1.7580993
        %v2077 = vsub.f32 %v2045, 1.7580993
        %v2078 = vsub.f32 %v2046, 1.7580993
        %v2079 = vsub.f32 %v2047, 1.7580993
        %v2080 = vsub.f32 %v2048, 1.7580993
        %v2081 = vsub.f32 %v2049, 1.7580993
        %v2082 = vsub.f32 %v2050, 1.7580993
        %v2083 = vsub.f32 %v2051, 1.7580993
        %v2084 = vsub.f32 %v2052, 1.7580993
        %v2085 = vsub.f32 %v2053, 1.7580993
        %v2086 = vsub.f32 %v2054, 1.7580993
        %v2087 = vsub.f32 %v2055, 1.7580993
        %v2088 = vsub.f32 %v2056, 1.7580993
        %v2089 = vsub.f32 %v2057, 1.7580993
        %v2090 = vsub.f32 %v2058, 1.7580993
        %v2091 = vsel %vm1899, %v1931, %v2059
        %v2092 = vsel %vm1900, %v1932, %v2060
        %v2093 = vsel %vm1901, %v1933, %v2061
        %v2094 = vsel %vm1902, %v1934, %v2062
        %v2095 = vsel %vm1903, %v1935, %v2063
        %v2096 = vsel %vm1904, %v1936, %v2064
        %v2097 = vsel %vm1905, %v1937, %v2065
        %v2098 = vsel %vm1906, %v1938, %v2066
        %v2099 = vsel %vm1907, %v1939, %v2067
        %v2100 = vsel %vm1908, %v1940, %v2068
        %v2101 = vsel %vm1909, %v1941, %v2069
        %v2102 = vsel %vm1910, %v1942, %v2070
        %v2103 = vsel %vm1911, %v1943, %v2071
        %v2104 = vsel %vm1912, %v1944, %v2072
        %v2105 = vsel %vm1913, %v1945, %v2073
        %v2106 = vsel %vm1914, %v1946, %v2074
        %v2107 = vsel %vm1915, %v1947, %v2075
        %v2108 = vsel %vm1916, %v1948, %v2076
        %v2109 = vsel %vm1917, %v1949, %v2077
        %v2110 = vsel %vm1918, %v1950, %v2078
        %v2111 = vsel %vm1919, %v1951, %v2079
        %v2112 = vsel %vm1920, %v1952, %v2080
        %v2113 = vsel %vm1921, %v1953, %v2081
        %v2114 = vsel %vm1922, %v1954, %v2082
        %v2115 = vsel %vm1923, %v1955, %v2083
        %v2116 = vsel %vm1924, %v1956, %v2084
        %v2117 = vsel %vm1925, %v1957, %v2085
        %v2118 = vsel %vm1926, %v1958, %v2086
        %v2119 = vsel %vm1927, %v1959, %v2087
        %v2120 = vsel %vm1928, %v1960, %v2088
        %v2121 = vsel %vm1929, %v1961, %v2089
        %v2122 = vsel %vm1930, %v1962, %v2090
        %v2123 = vpack.c.bf16 %v2092, %v2091
        %v2124 = vpack.c.bf16 %v2094, %v2093
        %v2125 = vpack.c.bf16 %v2096, %v2095
        %v2126 = vpack.c.bf16 %v2098, %v2097
        %v2127 = vpack.c.bf16 %v2100, %v2099
        %v2128 = vpack.c.bf16 %v2102, %v2101
        %v2129 = vpack.c.bf16 %v2104, %v2103
        %v2130 = vpack.c.bf16 %v2106, %v2105
        %v2131 = vpack.c.bf16 %v2108, %v2107
        %v2132 = vpack.c.bf16 %v2110, %v2109
        %v2133 = vpack.c.bf16 %v2112, %v2111
        %v2134 = vpack.c.bf16 %v2114, %v2113
        %v2135 = vpack.c.bf16 %v2116, %v2115
        %v2136 = vpack.c.bf16 %v2118, %v2117
        %v2137 = vpack.c.bf16 %v2120, %v2119
        %v2138 = vpack.c.bf16 %v2122, %v2121
        %v2139 = vld [vmem:[%s5] sm:$0xf]
        %v2140 = vld [vmem:[%s5 + $0x4] sm:$0xf]
        %v2141 = vld [vmem:[%s5 + $0x8] sm:$0xf]
        %v2142 = vld [vmem:[%s5 + $0xc] sm:$0xf]
        %v2143 = vld [vmem:[%s6] sm:$0xf]
        %v2144 = vld [vmem:[%s6 + $0x4] sm:$0xf]
        %v2145 = vld [vmem:[%s6 + $0x8] sm:$0xf]
        %v2146 = vld [vmem:[%s6 + $0xc] sm:$0xf]
        %v2151 = vunpack.c.l.b16 %v2143
        %v2152 = vunpack.c.l.b16 %v2144
        %v2153 = vunpack.c.l.b16 %v2145
        %v2154 = vunpack.c.l.b16 %v2146
        %v2155 = vpack.c.b16 %v2152, %v2151
        %v2156 = vpack.c.b16 %v2154, %v2153
        %v2158 = vsel %vm677, %v2155, 0
        %v2161 = vsel %vm677, %v2156, 0
        %v2164 = vsel %vm677, %v2123, 0
        %v2167 = vsel %vm677, %v2124, 0
        %v2170 = vsel %vm677, %v2125, 0
        %v2173 = vsel %vm677, %v2126, 0
        %v2176 = vsel %vm677, %v2127, 0
        %v2179 = vsel %vm677, %v2128, 0
        %v2182 = vsel %vm677, %v2129, 0
        %v2185 = vsel %vm677, %v2130, 0
        %v2188 = vsel %vm677, %v2131, 0
        %v2191 = vsel %vm677, %v2132, 0
        %v2194 = vsel %vm677, %v2133, 0
        %v2197 = vsel %vm677, %v2134, 0
        %v2200 = vsel %vm677, %v2135, 0
        %v2203 = vsel %vm677, %v2136, 0
        %v2206 = vsel %vm677, %v2137, 0
        %v2209 = vsel %vm677, %v2138, 0
        %2211 = vmatprep.subr.bf16.mxu0 0
        %2212 = vmatpush1.bf16.xpose.msra.mxu0 %v2185
        %2213 = vmatprep.subr.bf16.mxu0 0
        %2214 = vmatpush1.bf16.xpose.msra.mxu0 %v2182
        %2215 = vmatprep.subr.bf16.mxu0 0
        %2216 = vmatpush1.bf16.xpose.msra.mxu0 %v2179
        %2217 = vmatprep.subr.bf16.mxu0 0
        %2218 = vmatpush1.bf16.xpose.msra.mxu0 %v2176
        %2219 = vmatprep.subr.bf16.mxu0 0
        %2220 = vmatpush1.bf16.xpose.msra.mxu0 %v2173
        %2221 = vmatprep.subr.bf16.mxu0 0
        %2222 = vmatpush1.bf16.xpose.msra.mxu0 %v2170
        %2223 = vmatprep.subr.bf16.mxu0 0
        %2224 = vmatpush1.bf16.xpose.msra.mxu0 %v2167
        %2225 = vmatprep.subr.bf16.mxu0 0
        %2226 = vmatpush1.bf16.xpose.msra.mxu0 %v2164
        %2227 = vmatprep.subr.bf16.mxu0 0
        %2228 = vmatpush2.bf16.xpose.msra.mxu0 %v2209
        %2229 = vmatprep.subr.bf16.mxu0 0
        %2230 = vmatpush2.bf16.xpose.msra.mxu0 %v2206
        %2231 = vmatprep.subr.bf16.mxu0 0
        %2232 = vmatpush2.bf16.xpose.msra.mxu0 %v2203
        %2233 = vmatprep.subr.bf16.mxu0 0
        %2234 = vmatpush2.bf16.xpose.msra.mxu0 %v2200
        %2235 = vmatprep.subr.bf16.mxu0 0
        %2236 = vmatpush2.bf16.xpose.msra.mxu0 %v2197
        %2237 = vmatprep.subr.bf16.mxu0 0
        %2238 = vmatpush2.bf16.xpose.msra.mxu0 %v2194
        %2239 = vmatprep.subr.bf16.mxu0 0
        %2240 = vmatpush2.bf16.xpose.msra.mxu0 %v2191
        %2241 = vmatprep.subr.bf16.mxu0 0
        %2242 = vmatpush2.bf16.xpose.msra.mxu0 %v2188
        %2243 = vmatprep.mubr.bf16.mxu0 0
        %2244 = vmatmul.mubr.bf16.gmra.mxu0 %v2158
        %v2245 = vpop.f32.mrf.mxu0
        %v2246 = vadd.f32 0.0, %v2245
        %v2247 = vpop.f32.mrf.mxu0
        %v2248 = vadd.f32 0.0, %v2247
        %v2249 = vpop.f32.mrf.mxu0
        %v2250 = vadd.f32 0.0, %v2249
        %v2251 = vpop.f32.mrf.mxu0
        %v2252 = vadd.f32 0.0, %v2251
        %2253 = vmatprep.mubr.bf16.mxu0 0
        %2254 = vmatmul.mubr.bf16.gmra.mxu0 %v2161
        %v2255 = vpop.f32.mrf.mxu0
        %v2256 = vadd.f32 0.0, %v2255
        %v2257 = vpop.f32.mrf.mxu0
        %v2258 = vadd.f32 0.0, %v2257
        %v2259 = vpop.f32.mrf.mxu0
        %v2260 = vadd.f32 0.0, %v2259
        %v2261 = vpop.f32.mrf.mxu0
        %v2262 = vadd.f32 0.0, %v2261
        %2263 = vdwg.mxu0
        %v2268 = vunpack.c.l.b16 %v2139
        %v2269 = vunpack.c.l.b16 %v2140
        %v2270 = vunpack.c.l.b16 %v2141
        %v2271 = vunpack.c.l.b16 %v2142
        %v2272 = vpack.c.b16 %v2269, %v2268
        %v2273 = vpack.c.b16 %v2271, %v2270
        %v2275 = vsel %vm1341, %v2272, 0
        %v2278 = vsel %vm1341, %v2273, 0
        %2280 = vmatprep.subr.bf16.mxu0 0
        %2281 = vmatpush1.bf16.msra.mxu0 0
        %2282 = vmatprep.subr.bf16.mxu0 0
        %2283 = vmatpush1.bf16.msra.mxu0 0
        %2284 = vmatprep.subr.bf16.mxu0 0
        %2285 = vmatpush1.bf16.msra.mxu0 0
        %2286 = vmatprep.subr.bf16.mxu0 0
        %2287 = vmatpush1.bf16.msra.mxu0 0
        %2288 = vmatprep.subr.bf16.mxu0 %v1866
        %2289 = vmatpush1.bf16.msra.mxu0 %v1865
        %2290 = vmatprep.subr.bf16.mxu0 %v1864
        %2291 = vmatpush1.bf16.msra.mxu0 %v1863
        %2292 = vmatprep.subr.bf16.mxu0 %v1862
        %2293 = vmatpush1.bf16.msra.mxu0 %v1861
        %2294 = vmatprep.subr.bf16.mxu0 %v1860
        %2295 = vmatpush1.bf16.msra.mxu0 %v1859
        %2296 = vmatprep.subr.bf16.mxu0 0
        %2297 = vmatpush2.bf16.msra.mxu0 0
        %2298 = vmatprep.subr.bf16.mxu0 0
        %2299 = vmatpush2.bf16.msra.mxu0 0
        %2300 = vmatprep.subr.bf16.mxu0 0
        %2301 = vmatpush2.bf16.msra.mxu0 0
        %2302 = vmatprep.subr.bf16.mxu0 0
        %2303 = vmatpush2.bf16.msra.mxu0 0
        %2304 = vmatprep.subr.bf16.mxu0 0
        %2305 = vmatpush2.bf16.msra.mxu0 0
        %2306 = vmatprep.subr.bf16.mxu0 0
        %2307 = vmatpush2.bf16.msra.mxu0 0
        %2308 = vmatprep.subr.bf16.mxu0 0
        %2309 = vmatpush2.bf16.msra.mxu0 0
        %2310 = vmatprep.subr.bf16.mxu0 0
        %2311 = vmatpush2.bf16.msra.mxu0 0
        %2312 = vmatprep.mubr.bf16.mxu0 0
        %2313 = vmatmul.mubr.bf16.gmra.mxu0 %v2275
        %v2314 = vpop.f32.mrf.mxu0
        %v2315 = vadd.f32 %v2246, %v2314
        %v2316 = vpop.f32.mrf.mxu0
        %v2317 = vadd.f32 %v2248, %v2316
        %v2318 = vpop.f32.mrf.mxu0
        %v2319 = vadd.f32 %v2250, %v2318
        %v2320 = vpop.f32.mrf.mxu0
        %v2321 = vadd.f32 %v2252, %v2320
        %2322 = vmatprep.mubr.bf16.mxu0 0
        %2323 = vmatmul.mubr.bf16.gmra.mxu0 %v2278
        %v2324 = vpop.f32.mrf.mxu0
        %v2325 = vadd.f32 %v2256, %v2324
        %v2326 = vpop.f32.mrf.mxu0
        %v2327 = vadd.f32 %v2258, %v2326
        %v2328 = vpop.f32.mrf.mxu0
        %v2329 = vadd.f32 %v2260, %v2328
        %v2330 = vpop.f32.mrf.mxu0
        %v2331 = vadd.f32 %v2262, %v2330
        %2332 = vdwg.mxu0
        %vm2333 = vcmp.gt.f32.partialorder %v2315, 0.0
        %vm2334 = vcmp.gt.f32.partialorder %v2317, 0.0
        %vm2335 = vcmp.gt.f32.partialorder %v2319, 0.0
        %vm2336 = vcmp.gt.f32.partialorder %v2321, 0.0
        %vm2337 = vcmp.gt.f32.partialorder %v2325, 0.0
        %vm2338 = vcmp.gt.f32.partialorder %v2327, 0.0
        %vm2339 = vcmp.gt.f32.partialorder %v2329, 0.0
        %vm2340 = vcmp.gt.f32.partialorder %v2331, 0.0
        %v2341 = vmul.f32 %v2315, 1.050701
        %v2342 = vmul.f32 %v2317, 1.050701
        %v2343 = vmul.f32 %v2319, 1.050701
        %v2344 = vmul.f32 %v2321, 1.050701
        %v2345 = vmul.f32 %v2325, 1.050701
        %v2346 = vmul.f32 %v2327, 1.050701
        %v2347 = vmul.f32 %v2329, 1.050701
        %v2348 = vmul.f32 %v2331, 1.050701
        %v2349 = vmul.f32 %v2315, 1.442695
        %v2350 = vpow.pop %v2349
        %v2351 = vmul.f32 %v2317, 1.442695
        %v2352 = vpow.pop %v2351
        %v2353 = vmul.f32 %v2319, 1.442695
        %v2354 = vpow.pop %v2353
        %v2355 = vmul.f32 %v2321, 1.442695
        %v2356 = vpow.pop %v2355
        %v2357 = vmul.f32 %v2325, 1.442695
        %v2358 = vpow.pop %v2357
        %v2359 = vmul.f32 %v2327, 1.442695
        %v2360 = vpow.pop %v2359
        %v2361 = vmul.f32 %v2329, 1.442695
        %v2362 = vpow.pop %v2361
        %v2363 = vmul.f32 %v2331, 1.442695
        %v2364 = vpow.pop %v2363
        %v2365 = vmul.f32 %v2350, 1.7580993
        %v2366 = vmul.f32 %v2352, 1.7580993
        %v2367 = vmul.f32 %v2354, 1.7580993
        %v2368 = vmul.f32 %v2356, 1.7580993
        %v2369 = vmul.f32 %v2358, 1.7580993
        %v2370 = vmul.f32 %v2360, 1.7580993
        %v2371 = vmul.f32 %v2362, 1.7580993
        %v2372 = vmul.f32 %v2364, 1.7580993
        %v2373 = vsub.f32 %v2365, 1.7580993
        %v2374 = vsub.f32 %v2366, 1.7580993
        %v2375 = vsub.f32 %v2367, 1.7580993
        %v2376 = vsub.f32 %v2368, 1.7580993
        %v2377 = vsub.f32 %v2369, 1.7580993
        %v2378 = vsub.f32 %v2370, 1.7580993
        %v2379 = vsub.f32 %v2371, 1.7580993
        %v2380 = vsub.f32 %v2372, 1.7580993
        %v2381 = vsel %vm2333, %v2341, %v2373
        %v2382 = vsel %vm2334, %v2342, %v2374
        %v2383 = vsel %vm2335, %v2343, %v2375
        %v2384 = vsel %vm2336, %v2344, %v2376
        %v2385 = vsel %vm2337, %v2345, %v2377
        %v2386 = vsel %vm2338, %v2346, %v2378
        %v2387 = vsel %vm2339, %v2347, %v2379
        %v2388 = vsel %vm2340, %v2348, %v2380
        %v2389 = vld [vmem:[%s7] sm:$0xff]
        %v2390 = vld [vmem:[%s7 + $0x8] sm:$0xff]
        %v2391 = vld [vmem:[%s7 + $0x10] sm:$0xff]
        %v2392 = vld [vmem:[%s7 + $0x18] sm:$0xff]
        %2394 = vset.pattern.permute.xlu0 0
        %2395 = vperm.xlu0 %2394, %v2389
        %v2396 = vpop.permute.xlu0 %2395
        %2399 = vset.pattern.permute.xlu0 0
        %2400 = vperm.xlu0 %2399, %v2390
        %v2401 = vpop.permute.xlu0 %2400
        %2404 = vset.pattern.permute.xlu0 0
        %2405 = vperm.xlu0 %2404, %v2391
        %v2406 = vpop.permute.xlu0 %2405
        %2409 = vset.pattern.permute.xlu0 0
        %2410 = vperm.xlu0 %2409, %v2392
        %v2411 = vpop.permute.xlu0 %2410
        %v2413 = vmul.f32 %v2381, %v2396
        %v2414 = vmul.f32 %v2382, %v2396
        %v2415 = vmul.f32 %v2383, %v2401
        %v2416 = vmul.f32 %v2384, %v2401
        %v2417 = vmul.f32 %v2385, %v2406
        %v2418 = vmul.f32 %v2386, %v2406
        %v2419 = vmul.f32 %v2387, %v2411
        %v2420 = vmul.f32 %v2388, %v2411
        %v2421 = vadd.f32 %v2413, %v2415
        %v2422 = vadd.f32 %v2421, %v2417
        %v2423 = vadd.f32 %v2422, %v2419
        %v2424 = vrot.slane %v2423, 4
        %v2425 = vadd.f32 %v2423, %v2424
        %v2426 = vrot.slane %v2425, 2
        %v2427 = vadd.f32 %v2425, %v2426
        %v2428 = vrot.slane %v2427, 1
        %v2429 = vadd.f32 %v2427, %v2428
        %v2430 = vadd.f32 %v2414, %v2416
        %v2431 = vadd.f32 %v2430, %v2418
        %v2432 = vadd.f32 %v2431, %v2420
        %v2433 = vrot.slane %v2432, 4
        %v2434 = vadd.f32 %v2432, %v2433
        %v2435 = vrot.slane %v2434, 2
        %v2436 = vadd.f32 %v2434, %v2435
        %v2437 = vrot.slane %v2436, 1
        %v2438 = vadd.f32 %v2436, %v2437
        %v2439 = vld [vmem:[#allocation2] sm:$0x1]
        %2441 = vset.pattern.permute.xlu0 0
        %2442 = vperm.xlu0 %2441, %v2439
        %v2443 = vpop.permute.xlu0 %2442
        %v2445 = vlaneseq
        %v2446 = vshrl.u32 %v2445, 7
        %v2447 = vsub.s32 0, %v2446
        %v2448 = vrot.slane %v2443, %v2447
        %v2449 = vadd.f32 %v2429, %v2448
        %v2450 = vadd.f32 %v2438, %v2448
        %v2451 = vsub.f32 0.0, %v2449
        %v2452 = vsub.f32 0.0, %v2450
        %v2453 = vmul.f32 %v2451, 1.442695
        %v2454 = vpow.pop %v2453
        %v2455 = vmul.f32 %v2452, 1.442695
        %v2456 = vpow.pop %v2455
        %v2457 = vadd.f32 %v2454, 1.0
        %v2458 = vadd.f32 %v2456, 1.0
        %v2459 = vrcp.pop %v2457
        %v2460 = vrcp.pop %v2458
        %v2463 = vcombine.low %v2459, %v2460
        %v2465 = vunpack.c.l.s4 1966171168
        %v2466 = vunpack.c.0.s8 %v2465
        %v2467 = vlaneseq
        %v2468 = vshrl.u32 %v2467, 7
        %v2469 = vsub.s32 %v2466, %v2468
        %v2470 = vrot.slane %v2463, %v2469
        %v2472 = vunpack.c.l.s4 1966171168
        %v2473 = vunpack.c.0.s8 %v2472
        %v2474 = vlaneseq
        %v2475 = vshrl.u32 %v2474, 7
        %v2476 = vsub.s32 %v2473, %v2475
        %v2477 = vrot.slane %v2470, %v2476
        %v2479 = vlaneseq
        %vm2480 = vcmp.ge.s32.totalorder %v2479, 0
        %vm2481 = vcmp.lt.s32.totalorder %v2479, 256
        %vm2482 = vmand %vm2480, %vm2481
        %2483 = vst.msk [vmem:[%s328] sm:$0x3] %vm2482, %v2477
        %s2484 = sand.u32 %s227, 1
        %s2485 = scalar_lea.sflag [#allocation4], %s2484
        %s2486 = sand.u32 %s227, 1
        %s2487 = smul.addr %s2486, 2
        %s2488 = scalar_lea.vmem [#allocation3], %s2487
        // Predicated region
        $region57: #{tpu_custom_call.1} parent=55 // pred_check
          %p2489 = pneg %p237
        $region58: #{tpu_custom_call.1} parent=55 // pred_check_branch
          %2491 = sbr.rel (%p2489) target = $region60
        $region59: #{tpu_custom_call.1} parent=55 // pred_region
          %s2492 = smul.u32 2, %s25
          %s2494 = ssub.s32 32, 32
          %2495 = vsyncadd %s2485, %s2494
          %s2496 = smul.addr %s2492, 16
          %s2497 = scalar_lea.hbm %s9, %s2496
          %s2499 = sshll.u32 %s2488, 4
          %s2500 = int_to_ptr.vmem [resolvable:$true] %s2499
          %2502 = dma.vmem_to_hbm [thread:$0]  %s2500, 32, %s2497, %s2485
        $region60: #{tpu_custom_call.1} parent=55 // pred_fallthru
          _
      $region56: #{tpu_custom_call.1} parent=5 // pred_fallthru
        _
      %p2503 = scmp.le.s32.totalorder 2, %s20
      // Predicated region
      $region61: #{tpu_custom_call.1} parent=5 // pred_check
        %p2504 = pneg %p2503
      $region62: #{tpu_custom_call.1} parent=5 // pred_check_branch
        %2506 = sbr.rel (%p2504) target = $region64
      $region63: #{tpu_custom_call.1} parent=5 // pred_region
        %s2507 = ssub.s32 %s20, 2
        // Predicated region
        $region65: #{tpu_custom_call.1} parent=63 // pred_check
          %p2508 = pneg %p243
        $region66: #{tpu_custom_call.1} parent=63 // pred_check_branch
          %2510 = sbr.rel (%p2508) target = $region68
        $region67: #{tpu_custom_call.1} parent=63 // pred_region
          %s2511 = sand.u32 %s228, 1
          %s2512 = scalar_lea.sflag [#allocation4], %s2511
          %s2513 = sand.u32 %s228, 1
          %s2514 = smul.addr %s2513, 2
          %s2515 = scalar_lea.vmem [#allocation3], %s2514
          %2516 = dma.done %s2512, 32
        $region68: #{tpu_custom_call.1} parent=63 // pred_fallthru
          _
      $region64: #{tpu_custom_call.1} parent=5 // pred_fallthru
        _
    $region6: #{tpu_custom_call.1} parent=1 // loop_footer
      %s24 = sadd.s32 1, %s20
    $region7: #{tpu_custom_call.1} parent=1 // loop_footer_branch
      %19 = sbr.rel target = $region3
    $region8: #{tpu_custom_call.1} parent=1 // loop_exit
      _
    %2517 = vsyncpa [#allocation4], 1
    %s2518 = scalar_lea.sflag [#allocation4], 1
    %2519 = vsyncpa %s2518, 1

</llo_original>
